<compile_context>
chip_gen: v6e
topology: v6e:2x2x1
jax: 0.10.0
libtpu: 0.0.40
codegen_flags: <defaults>
</compile_context>

<pallas_src>
import numpy as np
import jax
import jax.numpy as jnp
from jax.experimental import pallas as pl
from jax.experimental.pallas import tpu as pltpu


def _round_up(x, m):
    return (x + m - 1) // m * m


# ----------------------------------------------------------------------------
# Fused kernel: one (batch, H-tile) step of DoubleConv + 2x2/2 maxpool.
# ----------------------------------------------------------------------------
def down_conv_kernel(x_ref, t1_ref, b1_ref, t2_ref, b2_ref, o_ref,
                     mid_ref, pool_ref):
    # x_ref  : (1, 1, TH+4, Wd1) bf16  lane-dense, W/H zero-padded input tile
    # t1_ref : (3, Wd1, Wd2)     bf16  conv1 banded weights (BN folded)
    # b1_ref : (1, Wd2)          f32   conv1 bias row (zero on W-halo lanes)
    # t2_ref : (3, Wd2, 2*Wo*C)  bf16  conv2 banded weights, [even-w | odd-w]
    # b2_ref : (1, 2*Wo*C)       f32   conv2 bias row
    # o_ref  : (1, 1, TH//2, Wo*C) f32
    # mid_ref: (TH+2, Wd2)       bf16  VMEM padded conv1 output (conv2 input)
    # pool_ref:(TH, Wo*C)        f32   VMEM W-pooled conv2 output
    TH2, Wd2 = mid_ref.shape            # TH+2, lane width of mid slab
    TH = TH2 - 2
    half = pool_ref.shape[1]            # Wo * Cout

    # ---- conv1 + BN + ReLU: 3 accumulating MXU matmuls (one per kernel row).
    acc1 = jnp.dot(x_ref[0, 0, 0:TH2, :], t1_ref[0],
                   preferred_element_type=jnp.float32)
    for ky in (1, 2):
        acc1 = acc1 + jnp.dot(x_ref[0, 0, ky:ky + TH2, :], t1_ref[ky],
                              preferred_element_type=jnp.float32)
    # bias row is zero on the W-halo lanes -> relu(0 + 0) = 0 reproduces
    # conv2's zero padding along W for free; store bf16 (next MXU operand).
    mid_ref[...] = jnp.maximum(acc1 + b1_ref[...], 0.0).astype(mid_ref.dtype)

    # ---- H-halo rows of mid are conv2's zero padding only at image borders.
    t = pl.program_id(1)

    @pl.when(t == 0)
    def _():
        mid_ref[0:1, :] = jnp.zeros((1, Wd2), mid_ref.dtype)

    @pl.when(t == pl.num_programs(1) - 1)
    def _():
        mid_ref[TH2 - 1:TH2, :] = jnp.zeros((1, Wd2), mid_ref.dtype)

    # ---- conv2 + BN + ReLU: same scheme; output columns are laid out as
    #      [even output pixels | odd output pixels] so the W-pool is elementwise.
    acc2 = jnp.dot(mid_ref[0:TH, :], t2_ref[0],
                   preferred_element_type=jnp.float32)
    for ky in (1, 2):
        acc2 = acc2 + jnp.dot(mid_ref[ky:ky + TH, :], t2_ref[ky],
                              preferred_element_type=jnp.float32)
    y2 = jnp.maximum(acc2 + b2_ref[...], 0.0)          # (TH, 2*Wo*Cout) f32

    # ---- 2x2 stride-2 maxpool: W via even|odd lane halves, H via stride-2 rows.
    pool_ref[...] = jnp.maximum(y2[:, :half], y2[:, half:])
    o_ref[0, 0] = jnp.maximum(pool_ref[pl.ds(0, TH // 2, 2), :],
                              pool_ref[pl.ds(1, TH // 2, 2), :]).astype(o_ref.dtype)


# ----------------------------------------------------------------------------
# Wrapper: layout plumbing, BN folding, banded weight construction, pallas_call.
# ----------------------------------------------------------------------------
def down_conv(x_nchw, params, *, tile_h=None):
    (w1, s1, b1), (w2, s2, b2) = params
    N, Cin, H, W = x_nchw.shape
    Cout = w1.shape[-1]
    assert H % 2 == 0 and W % 2 == 0, "MaxPool2d(2,2) path requires even H, W"
    TH = H if tile_h is None else tile_h
    assert TH % 2 == 0 and H % TH == 0, "tile_h must be even and divide H"
    nT = H // TH
    Ho, Wo = H // 2, W // 2

    Wd1 = _round_up((W + 2) * Cin, 128)      # input slab lane width
    Wd2 = _round_up((W + 2) * Cout, 128)     # mid slab lane width
    half = Wo * Cout                          # pooled lane width per parity half

    # ---- lane-dense, zero-padded input slab; H-tiles carry a 4-row halo.
    x = jnp.transpose(x_nchw, (0, 2, 3, 1)).astype(jnp.float32)        # NHWC
    xs = x.reshape(N, H, W * Cin)
    xs = jnp.pad(xs, ((0, 0), (0, 0), (Cin, Wd1 - (W + 1) * Cin)))     # W halo in lanes
    xs = jnp.pad(xs, ((0, 0), (2, 2), (0, 0)))                         # 2-row H halo
    # Overlapping tiles aren't expressible with Blocked index maps, so the
    # 4 halo rows per tile are replicated here (costs 4/TH extra input bytes).
    xt = jnp.stack([xs[:, t * TH: t * TH + TH + 4, :] for t in range(nT)],
                   axis=1).astype(jnp.bfloat16)                        # (N,nT,TH+4,Wd1)

    # ---- BN folding + banded ("Toeplitz") weights, built once at trace time.
    w1f = w1 * s1                                  # (3,3,Cin,Cout)
    w2f = w2 * s2                                  # (3,3,Cout,Cout)
    kx = np.arange(3)[:, None, None]
    wp = np.arange(W + 2)[None, :, None]
    wm = np.arange(W)[None, None, :]
    band = jnp.asarray((wp == wm + kx).astype(np.float32))   # (3, W+2, W)

    # conv1: per-ky (Wd1, Wd2); output pixel w lands at lanes (w+1)*Cout+co,
    # W-border lanes stay zero weight columns (padding folded into weights).
    t1 = jnp.einsum('xpw,yxio->ypiwo', band, w1f)
    t1 = t1.reshape(3, (W + 2) * Cin, W * Cout)
    t1 = jnp.pad(t1, ((0, 0), (0, Wd1 - (W + 2) * Cin),
                      (Cout, Wd2 - (W + 1) * Cout))).astype(jnp.bfloat16)
    b1r = jnp.pad(jnp.tile(b1, W), (Cout, Wd2 - (W + 1) * Cout))
    b1r = b1r.reshape(1, Wd2).astype(jnp.float32)

    # conv2: per-ky (Wd2, 2*Wo*Cout); columns = [even-w pixels | odd-w pixels].
    t2 = jnp.einsum('xpw,yxio->ypiwo', band, w2f)
    t2 = t2.reshape(3, (W + 2) * Cout, W, Cout)
    t2 = jnp.concatenate(
        [t2[:, :, 0::2, :].reshape(3, (W + 2) * Cout, half),
         t2[:, :, 1::2, :].reshape(3, (W + 2) * Cout, half)], axis=-1)
    t2 = jnp.pad(t2, ((0, 0), (0, Wd2 - (W + 2) * Cout), (0, 0))).astype(jnp.bfloat16)
    b2r = jnp.tile(b2, 2 * Wo).reshape(1, 2 * half).astype(jnp.float32)

    out = pl.pallas_call(
        down_conv_kernel,
        out_shape=jax.ShapeDtypeStruct((N, nT, TH // 2, half), jnp.float32),
        grid_spec=pltpu.PrefetchScalarGridSpec(
            num_scalar_prefetch=0,
            grid=(N, nT),
            in_specs=[
                pl.BlockSpec((1, 1, TH + 4, Wd1), lambda n, t: (n, t, 0, 0)),
                # constant index maps -> weights/biases DMA'd once, VMEM-resident
                pl.BlockSpec((3, Wd1, Wd2), lambda n, t: (0, 0, 0)),
                pl.BlockSpec((1, Wd2), lambda n, t: (0, 0)),
                pl.BlockSpec((3, Wd2, 2 * half), lambda n, t: (0, 0, 0)),
                pl.BlockSpec((1, 2 * half), lambda n, t: (0, 0)),
            ],
            out_specs=pl.BlockSpec((1, 1, TH // 2, half),
                                   lambda n, t: (n, t, 0, 0)),
            scratch_shapes=[
                pltpu.VMEM((TH + 2, Wd2), jnp.bfloat16),   # padded conv1 output
                pltpu.VMEM((TH, half), jnp.float32),       # W-pooled conv2 output
            ]),
        # Per-step VMEM is ~1 MiB at these sizes; keep the default scoped limit
        # rather than requesting physical-VMEM-sized budgets (v7x: 64 MiB total).
        compiler_params=pltpu.CompilerParams(
            dimension_semantics=("parallel", "parallel")),
    )(xt, t1, b1r, t2, b2r)

    out = out.reshape(N, Ho, Wo, Cout)
    # NHWC -> NCHW only to match the PyTorch module's output convention.
    return jnp.transpose(out, (0, 3, 1, 2))


# ----------------------------------------------------------------------------
# Parameter construction (deterministic, synthetic) + eval-mode BN folding.
# ----------------------------------------------------------------------------
def make_conv_bn_params(key, cin, cout, eps=1e-5):
    k = jax.random.split(key, 5)
    w = 0.1 * jax.random.normal(k[0], (3, 3, cin, cout), jnp.float32)   # HWIO
    b_conv = 0.1 * jax.random.normal(k[1], (cout,), jnp.float32)
    gamma = 1.0 + 0.1 * jax.random.normal(k[2], (cout,), jnp.float32)
    beta = 0.1 * jax.random.normal(k[3], (cout,), jnp.float32)
    rmean = 0.1 * jax.random.normal(k[4], (cout,), jnp.float32)
    rvar = jnp.ones((cout,), jnp.float32)
    scale = gamma / jnp.sqrt(rvar + eps)
    bias = (b_conv - rmean) * scale + beta
    return w, scale, bias


# ----------------------------------------------------------------------------
# Pure-JAX (f32) reference for validation.
# ----------------------------------------------------------------------------
def ref_down_conv(x_nchw, params):
    x = jnp.transpose(x_nchw, (0, 2, 3, 1)).astype(jnp.float32)
    for (w, s, b) in params:
        y = jax.lax.conv_general_dilated(
            x, w, window_strides=(1, 1), padding="SAME",
            dimension_numbers=("NHWC", "HWIO", "NHWC"))
        x = jnp.maximum(y * s + b, 0.0)
    N, H, W, C = x.shape
    x = x.reshape(N, H // 2, 2, W // 2, 2, C).max(axis=(2, 4))
    return jnp.transpose(x, (0, 3, 1, 2))


if __name__ == "__main__":
    key = jax.random.PRNGKey(0)
    kx_, k1, k2 = jax.random.split(key, 3)

    N, Cin, H, W = 2, 4, 16, 16
    Cout = 8
    x = jax.random.normal(kx_, (N, Cin, H, W), jnp.float32)   # NCHW like PyTorch

    params = (make_conv_bn_params(k1, Cin, Cout),
              make_conv_bn_params(k2, Cout, Cout))

    # tile_h=8 -> two H-tiles per image; exercises the halo/tiling path.
    out = jax.block_until_ready(down_conv(x, params, tile_h=8))
    ref = jax.block_until_ready(ref_down_conv(x, params))

    assert out.shape == (N, Cout, H // 2, W // 2), out.shape
    max_err = float(jnp.max(jnp.abs(out - ref)))
    # bf16 MXU operands with f32 accumulation -> loosened tolerance vs pure f32.
    assert jnp.allclose(out, ref, atol=3e-2, rtol=3e-2), max_err

    print("KERNEL_OK")
</pallas_src>

<mosaic_0001>
module attributes {stable_mosaic.version = 11 : i64} {
  func.func @down_conv_kernel(%arg0: i32, %arg1: i32, %arg2: memref<1x1x12x128xbf16, #tpu.memory_space<vmem>>, %arg3: memref<3x128x256xbf16, #tpu.memory_space<vmem>>, %arg4: memref<1x256xf32, #tpu.memory_space<vmem>>, %arg5: memref<3x256x128xbf16, #tpu.memory_space<vmem>>, %arg6: memref<1x128xf32, #tpu.memory_space<vmem>>, %arg7: memref<1x1x4x64xf32, #tpu.memory_space<vmem>>, %arg8: memref<10x256xbf16, #tpu.memory_space<vmem>>, %arg9: memref<8x64xf32, #tpu.memory_space<vmem>>) attributes {dimension_semantics = [#tpu.dimension_semantics<parallel>, #tpu.dimension_semantics<parallel>], iteration_bounds = array<i64: 2, 2>, scalar_prefetch = 0 : i64, scratch_operands = 2 : i64, tpu.core_type = #tpu.core_type<tc>, window_params = [{transform_indices = @transform_0, window_bounds = array<i64: 1, 1, 12, 128>}, {pipeline_mode = #tpu.pipeline_mode<synchronous>, transform_indices = @transform_1, window_bounds = array<i64: 3, 128, 256>}, {pipeline_mode = #tpu.pipeline_mode<synchronous>, transform_indices = @transform_2, window_bounds = array<i64: 1, 256>}, {pipeline_mode = #tpu.pipeline_mode<synchronous>, transform_indices = @transform_3, window_bounds = array<i64: 3, 256, 128>}, {pipeline_mode = #tpu.pipeline_mode<synchronous>, transform_indices = @transform_4, window_bounds = array<i64: 1, 128>}, {transform_indices = @transform_5, window_bounds = array<i64: 1, 1, 4, 64>}]} {
    %c0 = arith.constant 0 : index
    %c0_0 = arith.constant 0 : index
    %c0_1 = arith.constant 0 : index
    %c0_2 = arith.constant 0 : index
    %0 = vector.load %arg2[%c0, %c0_0, %c0_1, %c0_2] : memref<1x1x12x128xbf16, #tpu.memory_space<vmem>>, vector<1x1x10x128xbf16>
    %1 = vector.shape_cast %0 : vector<1x1x10x128xbf16> to vector<10x128xbf16>
    %c0_3 = arith.constant 0 : index
    %c0_4 = arith.constant 0 : index
    %c0_5 = arith.constant 0 : index
    %2 = vector.load %arg3[%c0_3, %c0_4, %c0_5] : memref<3x128x256xbf16, #tpu.memory_space<vmem>>, vector<1x128x256xbf16>
    %3 = vector.shape_cast %2 : vector<1x128x256xbf16> to vector<128x256xbf16>
    %cst = arith.constant dense<0.000000e+00> : vector<10x256xf32>
    %4 = tpu.matmul %1, %3, %cst {dimension_numbers = #tpu.dot_dimension_numbers<[1], [0], [0], [1], [0, 0, 1, 1], [], []>} : vector<10x128xbf16>, vector<128x256xbf16>, vector<10x256xf32> -> vector<10x256xf32>
    %c0_6 = arith.constant 0 : index
    %c0_7 = arith.constant 0 : index
    %c1 = arith.constant 1 : index
    %c0_8 = arith.constant 0 : index
    %5 = vector.load %arg2[%c0_6, %c0_7, %c1, %c0_8] : memref<1x1x12x128xbf16, #tpu.memory_space<vmem>>, vector<1x1x10x128xbf16>
    %6 = vector.shape_cast %5 : vector<1x1x10x128xbf16> to vector<10x128xbf16>
    %c1_9 = arith.constant 1 : index
    %c0_10 = arith.constant 0 : index
    %c0_11 = arith.constant 0 : index
    %7 = vector.load %arg3[%c1_9, %c0_10, %c0_11] : memref<3x128x256xbf16, #tpu.memory_space<vmem>>, vector<1x128x256xbf16>
    %8 = vector.shape_cast %7 : vector<1x128x256xbf16> to vector<128x256xbf16>
    %cst_12 = arith.constant dense<0.000000e+00> : vector<10x256xf32>
    %9 = tpu.matmul %6, %8, %cst_12 {dimension_numbers = #tpu.dot_dimension_numbers<[1], [0], [0], [1], [0, 0, 1, 1], [], []>} : vector<10x128xbf16>, vector<128x256xbf16>, vector<10x256xf32> -> vector<10x256xf32>
    %10 = arith.addf %4, %9 : vector<10x256xf32>
    %c0_13 = arith.constant 0 : index
    %c0_14 = arith.constant 0 : index
    %c2 = arith.constant 2 : index
    %c0_15 = arith.constant 0 : index
    %11 = vector.load %arg2[%c0_13, %c0_14, %c2, %c0_15] : memref<1x1x12x128xbf16, #tpu.memory_space<vmem>>, vector<1x1x10x128xbf16>
    %12 = vector.shape_cast %11 : vector<1x1x10x128xbf16> to vector<10x128xbf16>
    %c2_16 = arith.constant 2 : index
    %c0_17 = arith.constant 0 : index
    %c0_18 = arith.constant 0 : index
    %13 = vector.load %arg3[%c2_16, %c0_17, %c0_18] : memref<3x128x256xbf16, #tpu.memory_space<vmem>>, vector<1x128x256xbf16>
    %14 = vector.shape_cast %13 : vector<1x128x256xbf16> to vector<128x256xbf16>
    %cst_19 = arith.constant dense<0.000000e+00> : vector<10x256xf32>
    %15 = tpu.matmul %12, %14, %cst_19 {dimension_numbers = #tpu.dot_dimension_numbers<[1], [0], [0], [1], [0, 0, 1, 1], [], []>} : vector<10x128xbf16>, vector<128x256xbf16>, vector<10x256xf32> -> vector<10x256xf32>
    %16 = arith.addf %10, %15 : vector<10x256xf32>
    %c0_20 = arith.constant 0 : index
    %c0_21 = arith.constant 0 : index
    %17 = vector.load %arg4[%c0_20, %c0_21] : memref<1x256xf32, #tpu.memory_space<vmem>>, vector<1x256xf32>
    %18 = vector.broadcast %17 : vector<1x256xf32> to vector<10x256xf32>
    %19 = arith.addf %16, %18 : vector<10x256xf32>
    %cst_22 = arith.constant 0.000000e+00 : f32
    %20 = vector.broadcast %cst_22 : f32 to vector<10x256xf32>
    %21 = arith.maximumf %19, %20 : vector<10x256xf32>
    %22 = arith.truncf %21 : vector<10x256xf32> to vector<10x256xbf16>
    %c0_23 = arith.constant 0 : index
    %c0_24 = arith.constant 0 : index
    %23 = vector.load %arg8[%c0_23, %c0_24] : memref<10x256xbf16, #tpu.memory_space<vmem>>, vector<10x256xbf16>
    tpu.vector_store %arg8[%c0_23, %c0_24], %22 {strides = array<i32>} : memref<10x256xbf16, #tpu.memory_space<vmem>>, vector<10x256xbf16>,
    %c0_i32 = arith.constant 0 : i32
    %24 = arith.cmpi eq, %arg1, %c0_i32 : i32
    %25 = arith.extui %24 : i1 to i32
    %c0_i32_25 = arith.constant 0 : i32
    %26 = arith.cmpi ne, %25, %c0_i32_25 : i32
    scf.if %26 {
      %cst_58 = arith.constant 0.000000e+00 : bf16
      %59 = vector.broadcast %cst_58 : bf16 to vector<1x256xbf16>
      %c0_59 = arith.constant 0 : index
      %c0_60 = arith.constant 0 : index
      %60 = vector.load %arg8[%c0_59, %c0_60] : memref<10x256xbf16, #tpu.memory_space<vmem>>, vector<1x256xbf16>
      tpu.vector_store %arg8[%c0_59, %c0_60], %59 {strides = array<i32>} : memref<10x256xbf16, #tpu.memory_space<vmem>>, vector<1x256xbf16>,
    } else {
    }
    %c1_i32 = arith.constant 1 : i32
    %27 = arith.cmpi eq, %arg1, %c1_i32 : i32
    %28 = arith.extui %27 : i1 to i32
    %c0_i32_26 = arith.constant 0 : i32
    %29 = arith.cmpi ne, %28, %c0_i32_26 : i32
    scf.if %29 {
      %cst_58 = arith.constant 0.000000e+00 : bf16
      %59 = vector.broadcast %cst_58 : bf16 to vector<1x256xbf16>
      %c9 = arith.constant 9 : index
      %c0_59 = arith.constant 0 : index
      %60 = vector.load %arg8[%c9, %c0_59] : memref<10x256xbf16, #tpu.memory_space<vmem>>, vector<1x256xbf16>
      tpu.vector_store %arg8[%c9, %c0_59], %59 {strides = array<i32>} : memref<10x256xbf16, #tpu.memory_space<vmem>>, vector<1x256xbf16>,
    } else {
    }
    %c0_27 = arith.constant 0 : index
    %c0_28 = arith.constant 0 : index
    %30 = vector.load %arg8[%c0_27, %c0_28] : memref<10x256xbf16, #tpu.memory_space<vmem>>, vector<8x256xbf16>
    %c0_29 = arith.constant 0 : index
    %c0_30 = arith.constant 0 : index
    %c0_31 = arith.constant 0 : index
    %31 = vector.load %arg5[%c0_29, %c0_30, %c0_31] : memref<3x256x128xbf16, #tpu.memory_space<vmem>>, vector<1x256x128xbf16>
    %32 = vector.shape_cast %31 : vector<1x256x128xbf16> to vector<256x128xbf16>
    %cst_32 = arith.constant dense<0.000000e+00> : vector<8x128xf32>
    %33 = tpu.matmul %30, %32, %cst_32 {dimension_numbers = #tpu.dot_dimension_numbers<[1], [0], [0], [1], [0, 0, 1, 1], [], []>} : vector<8x256xbf16>, vector<256x128xbf16>, vector<8x128xf32> -> vector<8x128xf32>
    %c1_33 = arith.constant 1 : index
    %c0_34 = arith.constant 0 : index
    %34 = vector.load %arg8[%c1_33, %c0_34] : memref<10x256xbf16, #tpu.memory_space<vmem>>, vector<8x256xbf16>
    %c1_35 = arith.constant 1 : index
    %c0_36 = arith.constant 0 : index
    %c0_37 = arith.constant 0 : index
    %35 = vector.load %arg5[%c1_35, %c0_36, %c0_37] : memref<3x256x128xbf16, #tpu.memory_space<vmem>>, vector<1x256x128xbf16>
    %36 = vector.shape_cast %35 : vector<1x256x128xbf16> to vector<256x128xbf16>
    %cst_38 = arith.constant dense<0.000000e+00> : vector<8x128xf32>
    %37 = tpu.matmul %34, %36, %cst_38 {dimension_numbers = #tpu.dot_dimension_numbers<[1], [0], [0], [1], [0, 0, 1, 1], [], []>} : vector<8x256xbf16>, vector<256x128xbf16>, vector<8x128xf32> -> vector<8x128xf32>
    %38 = arith.addf %33, %37 : vector<8x128xf32>
    %c2_39 = arith.constant 2 : index
    %c0_40 = arith.constant 0 : index
    %39 = vector.load %arg8[%c2_39, %c0_40] : memref<10x256xbf16, #tpu.memory_space<vmem>>, vector<8x256xbf16>
    %c2_41 = arith.constant 2 : index
    %c0_42 = arith.constant 0 : index
    %c0_43 = arith.constant 0 : index
    %40 = vector.load %arg5[%c2_41, %c0_42, %c0_43] : memref<3x256x128xbf16, #tpu.memory_space<vmem>>, vector<1x256x128xbf16>
    %41 = vector.shape_cast %40 : vector<1x256x128xbf16> to vector<256x128xbf16>
    %cst_44 = arith.constant dense<0.000000e+00> : vector<8x128xf32>
    %42 = tpu.matmul %39, %41, %cst_44 {dimension_numbers = #tpu.dot_dimension_numbers<[1], [0], [0], [1], [0, 0, 1, 1], [], []>} : vector<8x256xbf16>, vector<256x128xbf16>, vector<8x128xf32> -> vector<8x128xf32>
    %43 = arith.addf %38, %42 : vector<8x128xf32>
    %c0_45 = arith.constant 0 : index
    %c0_46 = arith.constant 0 : index
    %44 = vector.load %arg6[%c0_45, %c0_46] : memref<1x128xf32, #tpu.memory_space<vmem>>, vector<1x128xf32>
    %45 = vector.broadcast %44 : vector<1x128xf32> to vector<8x128xf32>
    %46 = arith.addf %43, %45 : vector<8x128xf32>
    %cst_47 = arith.constant 0.000000e+00 : f32
    %47 = vector.broadcast %cst_47 : f32 to vector<8x128xf32>
    %48 = arith.maximumf %46, %47 : vector<8x128xf32>
    %49 = vector.extract_strided_slice %48 {offsets = [0, 0], sizes = [8, 64], strides = [1, 1]} : vector<8x128xf32> to vector<8x64xf32>
    %50 = vector.extract_strided_slice %48 {offsets = [0, 64], sizes = [8, 64], strides = [1, 1]} : vector<8x128xf32> to vector<8x64xf32>
    %51 = arith.maximumf %49, %50 : vector<8x64xf32>
    %c0_48 = arith.constant 0 : index
    %c0_49 = arith.constant 0 : index
    %52 = vector.load %arg9[%c0_48, %c0_49] : memref<8x64xf32, #tpu.memory_space<vmem>>, vector<8x64xf32>
    tpu.vector_store %arg9[%c0_48, %c0_49], %51 {strides = array<i32>} : memref<8x64xf32, #tpu.memory_space<vmem>>, vector<8x64xf32>,
    %c0_50 = arith.constant 0 : index
    %c0_51 = arith.constant 0 : index
    %53 = tpu.strided_load %arg9[%c0_50, %c0_51] {strides = array<i32: 2, 1>} : memref<8x64xf32, #tpu.memory_space<vmem>>, vector<4x64xf32>
    %c1_52 = arith.constant 1 : index
    %c0_53 = arith.constant 0 : index
    %54 = tpu.strided_load %arg9[%c1_52, %c0_53] {strides = array<i32: 2, 1>} : memref<8x64xf32, #tpu.memory_space<vmem>>, vector<4x64xf32>
    %55 = arith.maximumf %53, %54 : vector<4x64xf32>
    %c0_54 = arith.constant 0 : index
    %c0_55 = arith.constant 0 : index
    %c0_56 = arith.constant 0 : index
    %c0_57 = arith.constant 0 : index
    %56 = vector.load %arg7[%c0_54, %c0_55, %c0_56, %c0_57] : memref<1x1x4x64xf32, #tpu.memory_space<vmem>>, vector<1x1x4x64xf32>
    %57 = vector.shape_cast %56 : vector<1x1x4x64xf32> to vector<4x64xf32>
    %58 = vector.shape_cast %55 : vector<4x64xf32> to vector<1x1x4x64xf32>
    tpu.vector_store %arg7[%c0_54, %c0_55, %c0_56, %c0_57], %58 {strides = array<i32>} : memref<1x1x4x64xf32, #tpu.memory_space<vmem>>, vector<1x1x4x64xf32>,
    return
  }
  func.func @transform_0(%arg0: i32, %arg1: i32) -> (i32, i32, i32, i32) {
    %c0_i32 = arith.constant 0 : i32
    %c0_i32_0 = arith.constant 0 : i32
    %c0_i32_1 = arith.constant 0 : i32
    return %arg0, %arg1, %c0_i32, %c0_i32_0 : i32, i32, i32, i32
  }
  func.func @transform_1(%arg0: i32, %arg1: i32) -> (i32, i32, i32) {
    %c0_i32 = arith.constant 0 : i32
    %c0_i32_0 = arith.constant 0 : i32
    %c0_i32_1 = arith.constant 0 : i32
    %c0_i32_2 = arith.constant 0 : i32
    return %c0_i32, %c0_i32_0, %c0_i32_1 : i32, i32, i32
  }
  func.func @transform_2(%arg0: i32, %arg1: i32) -> (i32, i32) {
    %c0_i32 = arith.constant 0 : i32
    %c0_i32_0 = arith.constant 0 : i32
    %c0_i32_1 = arith.constant 0 : i32
    return %c0_i32, %c0_i32_0 : i32, i32
  }
  func.func @transform_3(%arg0: i32, %arg1: i32) -> (i32, i32, i32) {
    %c0_i32 = arith.constant 0 : i32
    %c0_i32_0 = arith.constant 0 : i32
    %c0_i32_1 = arith.constant 0 : i32
    %c0_i32_2 = arith.constant 0 : i32
    return %c0_i32, %c0_i32_0, %c0_i32_1 : i32, i32, i32
  }
  func.func @transform_4(%arg0: i32, %arg1: i32) -> (i32, i32) {
    %c0_i32 = arith.constant 0 : i32
    %c0_i32_0 = arith.constant 0 : i32
    %c0_i32_1 = arith.constant 0 : i32
    return %c0_i32, %c0_i32_0 : i32, i32
  }
  func.func @transform_5(%arg0: i32, %arg1: i32) -> (i32, i32, i32, i32) {
    %c0_i32 = arith.constant 0 : i32
    %c0_i32_0 = arith.constant 0 : i32
    %c0_i32_1 = arith.constant 0 : i32
    return %arg0, %arg1, %c0_i32, %c0_i32_0 : i32, i32, i32, i32
  }
}

</mosaic_0001>

<llo_original>
// kernel: tpu_custom_call.1
$region0: #{tpu_custom_call.1}
  #allocation0 [shape = 'u32[]', space=smem, size = 0x4, offset = 0x4, fixed_abs, tag = 'smem constant byte address 0x4 - core index']
  #allocation1 [shape = 'u32[144,128]{1,0:T(1,128)}', space=vmem, size = 0x12000, scoped, tag = 'internal scratch']
  #allocation2 [shape = 'bf16[10,256]{1,0:T(8,128)(2,1)}', space=vmem, size = 0x2000, scoped, tag = 'scratch operand']
  #allocation3 [shape = 'f32[8,64]{1,0:T(8,128)}', space=vmem, size = 0x1000, scoped, tag = 'scratch operand']
  %s0 = inlined_call_operand.vmem [shape: bf16[2,2,12,128], index: 0, kind: input, shape index: {}]
  %s1 = inlined_call_operand.hbm [shape: bf16[3,128,256], index: 1, kind: input, shape index: {}]
  %s2 = inlined_call_operand.vmem [shape: f32[1,256], index: 2, kind: input, shape index: {}]
  %s3 = inlined_call_operand.hbm [shape: bf16[3,256,128], index: 3, kind: input, shape index: {}]
  %s4 = inlined_call_operand.vmem [shape: f32[1,128], index: 4, kind: input, shape index: {}]
  %s5 = inlined_call_operand.hbm [shape: f32[2,2,4,64], index: 5, kind: output, shape index: {}]
  %s6 = sld [smem:[#allocation0]]
  $region69: #{tpu_custom_call.1} parent=0
    _
  %s8 = ssub.s32 1, %s6
  %s9 = scalar_select 0, %s8, %s6
  $region1: #{tpu_custom_call.1} parent=0
    #allocation4 [shape = 'u8[196608]{0}', space=vmem, size = 0x30000, scoped, tag = 'input window, operand 1, single buffered']
    #allocation5 [shape = 's32[2]{0}', space=sflag, size = 0x8, scoped, tag = 'scoped memory for tpu_custom_call.1']
    #allocation6 [shape = 's32[2]{0}', space=sflag, size = 0x8, scoped, tag = 'scoped memory for tpu_custom_call.1']
    #allocation7 [shape = 'u8[196608]{0}', space=vmem, size = 0x30000, scoped, tag = 'input window, operand 3, single buffered']
    #allocation8 [shape = 's32[1]{0}', space=sflag, size = 0x4, scoped, tag = 'scoped memory for tpu_custom_call.1']
    #allocation9 [shape = 'u8[4096]{0}', space=vmem, size = 0x1000, scoped, tag = 'output window, operand 0']
    %10 = vsyncpa [#allocation5], 0
    %11 = vsyncpa [#allocation8], 0
    %12 = vsyncpa [#allocation6], 0
    %s13 = scalar_lea.sflag [#allocation6], 1
    %14 = vsyncpa %s13, 0
    loop: start=0, step=1, limit=6
    $region2: #{tpu_custom_call.1} parent=1 // loop_pre_header
      _
    $region3: #{tpu_custom_call.1} parent=1 // loop_header
      %s16 = sphi 0, %s20
      %p17 = scmp.ge.s32.totalorder %s16, 6
      %s23 = sphi 0, %s35
      %s24 = sphi 0, %s31
      %s25 = sphi 0, %s23
      %s26 = sphi 0, %s24
      %s27 = sphi 0, %s25
      %s28 = sphi 0, %s26
      %s40 = sphi 0, %s42
      %s43 = sphi 0, %s40
      %s44 = sphi 0, %s43
      %s60 = sphi 0, %s44
      %s64 = sphi 0, %s64
      %s66 = sphi 0, %s64
      %s67 = sphi 0, %s66
      %s81 = sphi 0, %s67
      %s85 = sphi 0, %s85
      %s87 = sphi 0, %s85
      %s88 = sphi 0, %s87
      %s102 = sphi 0, %s88
      %s106 = sphi 0, %s106
      %s108 = sphi 0, %s106
      %s109 = sphi 0, %s108
      %s123 = sphi 0, %s109
      %s127 = sphi 0, %s127
      %s129 = sphi 0, %s127
      %s130 = sphi 0, %s129
      %s144 = sphi 0, %s130
      %s152 = sphi 0, %s154
      %s155 = sphi 0, %s152
      %s156 = sphi 0, %s155
      %s172 = sphi 0, %s156
    $region4: #{tpu_custom_call.1} parent=1 // loop_header_branch
      %19 = sbr.rel (%p17) target = $region8
    $region5: #{tpu_custom_call.1} parent=1 // loop_body
      %s21 = ssub.s32 %s16, 1
      %s22 = ssub.s32 %s16, 2
      %s29 = sadd.s32 1, %s24
      %p30 = scmp.ge.s32.totalorder %s29, 2
      %s31 = scalar_select %p30, 0, %s29
      %s32 = sadd.s32 1, %s23
      %s33 = scalar_select %p30, %s32, %s23
      %p34 = scmp.ge.s32.totalorder %s33, 2
      %s35 = scalar_select %p34, 0, %s33
      %s36 = ssub.s32 %s23, %s35
      %s37 = ssub.s32 %s24, %s31
      %s38 = sor.u32 %s36, %s37
      %p39 = scmp.eq.s32.totalorder %s38, 0
      %s41 = sadd.s32 %s40, 1
      %s42 = scalar_select %p39, %s40, %s41
      %p45 = pneg %p39
      %p46 = scmp.eq.s32.totalorder %s16, 3
      %p47 = por %p45, %p46
      %p48 = scmp.ne.s32.totalorder %s40, %s43
      %p49 = scmp.eq.s32.totalorder %s16, 0
      %p50 = por %p48, %p49
      %p51 = scmp.ne.s32.totalorder %s40, %s43
      %p52 = scmp.eq.s32.totalorder %s21, 3
      %p53 = por %p51, %p52
      %p54 = scmp.ne.s32.totalorder %s43, %s44
      %p55 = scmp.eq.s32.totalorder %s21, 0
      %p56 = por %p54, %p55
      %p57 = scmp.ne.s32.totalorder %s43, %s44
      %p58 = scmp.eq.s32.totalorder %s22, 3
      %p59 = por %p57, %p58
      %p61 = scmp.ne.s32.totalorder %s44, %s60
      %p62 = scmp.eq.s32.totalorder %s22, 0
      %p63 = por %p61, %p62
      %s65 = sadd.s32 %s64, 1
      %p68 = scmp.eq.s32.totalorder %s16, 3
      %p69 = scmp.ne.s32.totalorder %s64, %s66
      %p70 = scmp.eq.s32.totalorder %s16, 0
      %p71 = por %p69, %p70
      %p72 = scmp.ne.s32.totalorder %s64, %s66
      %p73 = scmp.eq.s32.totalorder %s21, 3
      %p74 = por %p72, %p73
      %p75 = scmp.ne.s32.totalorder %s66, %s67
      %p76 = scmp.eq.s32.totalorder %s21, 0
      %p77 = por %p75, %p76
      %p78 = scmp.ne.s32.totalorder %s66, %s67
      %p79 = scmp.eq.s32.totalorder %s22, 3
      %p80 = por %p78, %p79
      %p82 = scmp.ne.s32.totalorder %s67, %s81
      %p83 = scmp.eq.s32.totalorder %s22, 0
      %p84 = por %p82, %p83
      %s86 = sadd.s32 %s85, 1
      %p89 = scmp.eq.s32.totalorder %s16, 3
      %p90 = scmp.ne.s32.totalorder %s85, %s87
      %p91 = scmp.eq.s32.totalorder %s16, 0
      %p92 = por %p90, %p91
      %p93 = scmp.ne.s32.totalorder %s85, %s87
      %p94 = scmp.eq.s32.totalorder %s21, 3
      %p95 = por %p93, %p94
      %p96 = scmp.ne.s32.totalorder %s87, %s88
      %p97 = scmp.eq.s32.totalorder %s21, 0
      %p98 = por %p96, %p97
      %p99 = scmp.ne.s32.totalorder %s87, %s88
      %p100 = scmp.eq.s32.totalorder %s22, 3
      %p101 = por %p99, %p100
      %p103 = scmp.ne.s32.totalorder %s88, %s102
      %p104 = scmp.eq.s32.totalorder %s22, 0
      %p105 = por %p103, %p104
      %s107 = sadd.s32 %s106, 1
      %p110 = scmp.eq.s32.totalorder %s16, 3
      %p111 = scmp.ne.s32.totalorder %s106, %s108
      %p112 = scmp.eq.s32.totalorder %s16, 0
      %p113 = por %p111, %p112
      %p114 = scmp.ne.s32.totalorder %s106, %s108
      %p115 = scmp.eq.s32.totalorder %s21, 3
      %p116 = por %p114, %p115
      %p117 = scmp.ne.s32.totalorder %s108, %s109
      %p118 = scmp.eq.s32.totalorder %s21, 0
      %p119 = por %p117, %p118
      %p120 = scmp.ne.s32.totalorder %s108, %s109
      %p121 = scmp.eq.s32.totalorder %s22, 3
      %p122 = por %p120, %p121
      %p124 = scmp.ne.s32.totalorder %s109, %s123
      %p125 = scmp.eq.s32.totalorder %s22, 0
      %p126 = por %p124, %p125
      %s128 = sadd.s32 %s127, 1
      %p131 = scmp.eq.s32.totalorder %s16, 3
      %p132 = scmp.ne.s32.totalorder %s127, %s129
      %p133 = scmp.eq.s32.totalorder %s16, 0
      %p134 = por %p132, %p133
      %p135 = scmp.ne.s32.totalorder %s127, %s129
      %p136 = scmp.eq.s32.totalorder %s21, 3
      %p137 = por %p135, %p136
      %p138 = scmp.ne.s32.totalorder %s129, %s130
      %p139 = scmp.eq.s32.totalorder %s21, 0
      %p140 = por %p138, %p139
      %p141 = scmp.ne.s32.totalorder %s129, %s130
      %p142 = scmp.eq.s32.totalorder %s22, 3
      %p143 = por %p141, %p142
      %p145 = scmp.ne.s32.totalorder %s130, %s144
      %p146 = scmp.eq.s32.totalorder %s22, 0
      %p147 = por %p145, %p146
      %s148 = ssub.s32 %s23, %s35
      %s149 = ssub.s32 %s24, %s31
      %s150 = sor.u32 %s148, %s149
      %p151 = scmp.eq.s32.totalorder %s150, 0
      %s153 = sadd.s32 %s152, 1
      %s154 = scalar_select %p151, %s152, %s153
      %p157 = pneg %p151
      %p158 = scmp.eq.s32.totalorder %s16, 3
      %p159 = por %p157, %p158
      %p160 = scmp.ne.s32.totalorder %s152, %s155
      %p161 = scmp.eq.s32.totalorder %s16, 0
      %p162 = por %p160, %p161
      %p163 = scmp.ne.s32.totalorder %s152, %s155
      %p164 = scmp.eq.s32.totalorder %s21, 3
      %p165 = por %p163, %p164
      %p166 = scmp.ne.s32.totalorder %s155, %s156
      %p167 = scmp.eq.s32.totalorder %s21, 0
      %p168 = por %p166, %p167
      %p169 = scmp.ne.s32.totalorder %s155, %s156
      %p170 = scmp.eq.s32.totalorder %s22, 3
      %p171 = por %p169, %p170
      %p173 = scmp.ne.s32.totalorder %s156, %s172
      %p174 = scmp.eq.s32.totalorder %s22, 0
      %p175 = por %p173, %p174
      %p176 = scmp.le.s32.totalorder 1, %s16
      %p177 = scmp.lt.s32.totalorder %s16, 5
      %p178 = pnand %p176, %p177
      %p179 = pneg %p178
      // Predicated region
      $region9: #{tpu_custom_call.1} parent=5 // pred_check
        _
      $region10: #{tpu_custom_call.1} parent=5 // pred_check_branch
        %181 = sbr.rel (%p178) target = $region12
      $region11: #{tpu_custom_call.1} parent=5 // pred_region
        %s182 = ssub.s32 %s16, 1
        // Predicated region
        $region13: #{tpu_custom_call.1} parent=11 // pred_check
          %p183 = pneg %p77
        $region14: #{tpu_custom_call.1} parent=11 // pred_check_branch
          %185 = sbr.rel (%p183) target = $region16
        $region15: #{tpu_custom_call.1} parent=11 // pred_region
          %s187 = ssub.s32 6144, 6144
          %188 = vsyncadd [#allocation5], %s187
          %s189 = sshll.u32 [#allocation4], 4
          %s190 = int_to_ptr.vmem [resolvable:$true] %s189
          %195 = dma.hbm_to_vmem [thread:$0]  %s1, 6144, %s190, [#allocation5], 128, 128, 8
        $region16: #{tpu_custom_call.1} parent=11 // pred_fallthru
          _
        // Predicated region
        $region17: #{tpu_custom_call.1} parent=11 // pred_check
          %p196 = pneg %p98
        $region18: #{tpu_custom_call.1} parent=11 // pred_check_branch
          %198 = sbr.rel (%p196) target = $region20
        $region19: #{tpu_custom_call.1} parent=11 // pred_region
          _
        $region20: #{tpu_custom_call.1} parent=11 // pred_fallthru
          _
        // Predicated region
        $region21: #{tpu_custom_call.1} parent=11 // pred_check
          %p199 = pneg %p119
        $region22: #{tpu_custom_call.1} parent=11 // pred_check_branch
          %201 = sbr.rel (%p199) target = $region24
        $region23: #{tpu_custom_call.1} parent=11 // pred_region
          %s203 = ssub.s32 6144, 6144
          %204 = vsyncadd [#allocation8], %s203
          %s205 = sshll.u32 [#allocation7], 4
          %s206 = int_to_ptr.vmem [resolvable:$true] %s205
          %211 = dma.hbm_to_vmem [thread:$0]  %s3, 6144, %s206, [#allocation8], 64, 64, 4
        $region24: #{tpu_custom_call.1} parent=11 // pred_fallthru
          _
        // Predicated region
        $region25: #{tpu_custom_call.1} parent=11 // pred_check
          %p212 = pneg %p140
        $region26: #{tpu_custom_call.1} parent=11 // pred_check_branch
          %214 = sbr.rel (%p212) target = $region28
        $region27: #{tpu_custom_call.1} parent=11 // pred_region
          _
        $region28: #{tpu_custom_call.1} parent=11 // pred_fallthru
          _
      $region12: #{tpu_custom_call.1} parent=5 // pred_fallthru
        _
      %p215 = scmp.lt.s32.totalorder %s16, 4
      // Predicated region
      $region29: #{tpu_custom_call.1} parent=5 // pred_check
        %p216 = pneg %p215
      $region30: #{tpu_custom_call.1} parent=5 // pred_check_branch
        %218 = sbr.rel (%p216) target = $region32
      $region31: #{tpu_custom_call.1} parent=5 // pred_region
        // Predicated region
        $region33: #{tpu_custom_call.1} parent=31 // pred_check
          %p219 = pneg %p50
        $region34: #{tpu_custom_call.1} parent=31 // pred_check_branch
          %221 = sbr.rel (%p219) target = $region36
        $region35: #{tpu_custom_call.1} parent=31 // pred_region
          %p222 = scmp.lt.s32.totalorder %s23, 1
          %s223 = scalar_select %p222, %s23, 1
          %p224 = scmp.lt.s32.totalorder %s24, 1
          %s225 = scalar_select %p224, %s24, 1
          %s226 = smul.addr %s225, 2
          %s227 = smul.addr %s223, 4
          %s228 = sadd.s32 %s226, %s227
          %s229 = smul.addr %s228, 4
          %s230 = scalar_lea.vmem %s0, %s229
        $region36: #{tpu_custom_call.1} parent=31 // pred_fallthru
          _
      $region32: #{tpu_custom_call.1} parent=5 // pred_fallthru
        _
      %p231 = scmp.le.s32.totalorder 1, %s16
      %p232 = scmp.lt.s32.totalorder %s16, 5
      %p233 = pnand %p231, %p232
      %p234 = pneg %p233
      // Predicated region
      $region37: #{tpu_custom_call.1} parent=5 // pred_check
        _
      $region38: #{tpu_custom_call.1} parent=5 // pred_check_branch
        %236 = sbr.rel (%p233) target = $region40
      $region39: #{tpu_custom_call.1} parent=5 // pred_region
        %s237 = ssub.s32 %s16, 1
        // Predicated region
        $region41: #{tpu_custom_call.1} parent=39 // pred_check
          %p238 = pneg %p77
        $region42: #{tpu_custom_call.1} parent=39 // pred_check_branch
          %240 = sbr.rel (%p238) target = $region44
        $region43: #{tpu_custom_call.1} parent=39 // pred_region
          %241 = dma.done [#allocation5], 6144
        $region44: #{tpu_custom_call.1} parent=39 // pred_fallthru
          _
        // Predicated region
        $region45: #{tpu_custom_call.1} parent=39 // pred_check
          %p242 = pneg %p119
        $region46: #{tpu_custom_call.1} parent=39 // pred_check_branch
          %244 = sbr.rel (%p242) target = $region48
        $region47: #{tpu_custom_call.1} parent=39 // pred_region
          %245 = dma.done [#allocation8], 6144
        $region48: #{tpu_custom_call.1} parent=39 // pred_fallthru
          _
        %p246 = scmp.lt.s32.totalorder %s25, 1
        %s247 = scalar_select %p246, %s25, 1
        %p248 = scmp.lt.s32.totalorder %s26, 1
        %s249 = scalar_select %p248, %s26, 1
        %s250 = smul.addr %s249, 2
        %s251 = smul.addr %s247, 4
        %s252 = sadd.s32 %s250, %s251
        %s253 = smul.addr %s252, 4
        %s254 = scalar_lea.vmem %s0, %s253
        %p255 = pneg %p56
        %p256 = pneg %p53
        %p257 = pneg %p77
        %p258 = pneg %p74
        %p259 = pneg %p98
        %p260 = pneg %p95
        %p261 = pneg %p119
        %p262 = pneg %p116
        %p263 = pneg %p140
        %p264 = pneg %p137
        %p265 = pneg %p168
        %p266 = pneg %p165
        %s267 = sand.u32 %s155, 1
        %s268 = scalar_lea.sflag [#allocation6], %s267
        %s269 = sand.u32 %s155, 1
        %s270 = smul.addr %s269, 4
        %s271 = scalar_lea.vmem [#allocation9], %s270
        %p272 = scmp.lt.s32.totalorder %s25, 1
        %s273 = scalar_select %p272, %s25, 1
        %p274 = scmp.lt.s32.totalorder %s26, 1
        %s275 = scalar_select %p274, %s26, 1
        %s276 = smul.addr %s275, 2
        %s277 = smul.addr %s273, 4
        %s278 = sadd.s32 %s276, %s277
        %s279 = smul.addr %s278, 4
        %s280 = scalar_lea.vmem %s0, %s279
        %v282 = vld [vmem:[%s280] sm:$0xf]
        %v283 = vld [vmem:[%s280 + $0x4] sm:$0x1]
        %v284 = vld [vmem:[#allocation4] sm:$0xff]
        %v285 = vld [vmem:[#allocation4 + $0x8] sm:$0xff]
        %v286 = vld [vmem:[#allocation4 + $0x10] sm:$0xff]
        %v287 = vld [vmem:[#allocation4 + $0x18] sm:$0xff]
        %v288 = vld [vmem:[#allocation4 + $0x20] sm:$0xff]
        %v289 = vld [vmem:[#allocation4 + $0x28] sm:$0xff]
        %v290 = vld [vmem:[#allocation4 + $0x30] sm:$0xff]
        %v291 = vld [vmem:[#allocation4 + $0x38] sm:$0xff]
        %v292 = vld [vmem:[#allocation4 + $0x40] sm:$0xff]
        %v293 = vld [vmem:[#allocation4 + $0x48] sm:$0xff]
        %v294 = vld [vmem:[#allocation4 + $0x50] sm:$0xff]
        %v295 = vld [vmem:[#allocation4 + $0x58] sm:$0xff]
        %v296 = vld [vmem:[#allocation4 + $0x60] sm:$0xff]
        %v297 = vld [vmem:[#allocation4 + $0x68] sm:$0xff]
        %v298 = vld [vmem:[#allocation4 + $0x70] sm:$0xff]
        %v299 = vld [vmem:[#allocation4 + $0x78] sm:$0xff]
        %v300 = vld [vmem:[%s280 + $0x4] sm:$0x3]
        %s301 = scalar_lea.vmem [#allocation4], 128
        %v302 = vld [vmem:[%s301] sm:$0xff]
        %v303 = vld [vmem:[%s301 + $0x8] sm:$0xff]
        %v304 = vld [vmem:[%s301 + $0x10] sm:$0xff]
        %v305 = vld [vmem:[%s301 + $0x18] sm:$0xff]
        %v306 = vld [vmem:[%s301 + $0x20] sm:$0xff]
        %v307 = vld [vmem:[%s301 + $0x28] sm:$0xff]
        %v308 = vld [vmem:[%s301 + $0x30] sm:$0xff]
        %v309 = vld [vmem:[%s301 + $0x38] sm:$0xff]
        %v310 = vld [vmem:[%s301 + $0x40] sm:$0xff]
        %v311 = vld [vmem:[%s301 + $0x48] sm:$0xff]
        %v312 = vld [vmem:[%s301 + $0x50] sm:$0xff]
        %v313 = vld [vmem:[%s301 + $0x58] sm:$0xff]
        %v314 = vld [vmem:[%s301 + $0x60] sm:$0xff]
        %v315 = vld [vmem:[%s301 + $0x68] sm:$0xff]
        %v316 = vld [vmem:[%s301 + $0x70] sm:$0xff]
        %v317 = vld [vmem:[%s301 + $0x78] sm:$0xff]
        %v320 = vunpack.c.l.b16 %v282
        %v321 = vunpack.c.l.b16 %v300
        %v322 = vpack.c.b16 %v321, %v320
        %v324 = vshrl.u32 %v322, 16
        %v326 = vshll.u32 %v322, 16
        %v328 = vrot.slane %v326, 1
        %v329 = vor.u32 %v324, %v328
        %v347 = vunpack.c.l.b16 %v302
        %v348 = vunpack.c.h.b16 %v302
        %v349 = vunpack.c.l.b16 %v303
        %v350 = vunpack.c.h.b16 %v303
        %v351 = vunpack.c.l.b16 %v304
        %v352 = vunpack.c.h.b16 %v304
        %v353 = vunpack.c.l.b16 %v305
        %v354 = vunpack.c.h.b16 %v305
        %v355 = vunpack.c.l.b16 %v306
        %v356 = vunpack.c.h.b16 %v306
        %v357 = vunpack.c.l.b16 %v307
        %v358 = vunpack.c.h.b16 %v307
        %v359 = vunpack.c.l.b16 %v308
        %v360 = vunpack.c.h.b16 %v308
        %v361 = vunpack.c.l.b16 %v309
        %v362 = vunpack.c.h.b16 %v309
        %v363 = vunpack.c.l.b16 %v310
        %v364 = vunpack.c.h.b16 %v310
        %v365 = vunpack.c.l.b16 %v311
        %v366 = vunpack.c.h.b16 %v311
        %v367 = vunpack.c.l.b16 %v312
        %v368 = vunpack.c.h.b16 %v312
        %v369 = vunpack.c.l.b16 %v313
        %v370 = vunpack.c.h.b16 %v313
        %v371 = vunpack.c.l.b16 %v314
        %v372 = vunpack.c.h.b16 %v314
        %v373 = vunpack.c.l.b16 %v315
        %v374 = vunpack.c.h.b16 %v315
        %v375 = vunpack.c.l.b16 %v316
        %v376 = vunpack.c.h.b16 %v316
        %v377 = vunpack.c.l.b16 %v317
        %v378 = vunpack.c.h.b16 %v317
        %v379 = vpack.c.b16 %v349, %v347
        %v380 = vpack.c.b16 %v350, %v348
        %v381 = vpack.c.b16 %v353, %v351
        %v382 = vpack.c.b16 %v354, %v352
        %v383 = vpack.c.b16 %v357, %v355
        %v384 = vpack.c.b16 %v358, %v356
        %v385 = vpack.c.b16 %v361, %v359
        %v386 = vpack.c.b16 %v362, %v360
        %v387 = vpack.c.b16 %v365, %v363
        %v388 = vpack.c.b16 %v366, %v364
        %v389 = vpack.c.b16 %v369, %v367
        %v390 = vpack.c.b16 %v370, %v368
        %v391 = vpack.c.b16 %v373, %v371
        %v392 = vpack.c.b16 %v374, %v372
        %v393 = vpack.c.b16 %v377, %v375
        %v394 = vpack.c.b16 %v378, %v376
        %411 = vmatprep.subr.bf16.mxu0 %v394
        %412 = vmatpush1.bf16.msra.mxu0 %v393
        %413 = vmatprep.subr.bf16.mxu0 %v392
        %414 = vmatpush1.bf16.msra.mxu0 %v391
        %415 = vmatprep.subr.bf16.mxu0 %v390
        %416 = vmatpush1.bf16.msra.mxu0 %v389
        %417 = vmatprep.subr.bf16.mxu0 %v388
        %418 = vmatpush1.bf16.msra.mxu0 %v387
        %419 = vmatprep.subr.bf16.mxu0 %v386
        %420 = vmatpush1.bf16.msra.mxu0 %v385
        %421 = vmatprep.subr.bf16.mxu0 %v384
        %422 = vmatpush1.bf16.msra.mxu0 %v383
        %423 = vmatprep.subr.bf16.mxu0 %v382
        %424 = vmatpush1.bf16.msra.mxu0 %v381
        %425 = vmatprep.subr.bf16.mxu0 %v380
        %426 = vmatpush1.bf16.msra.mxu0 %v379
        %427 = vmatprep.subr.bf16.mxu0 0
        %428 = vmatpush2.bf16.msra.mxu0 0
        %429 = vmatprep.subr.bf16.mxu0 0
        %430 = vmatpush2.bf16.msra.mxu0 0
        %431 = vmatprep.subr.bf16.mxu0 0
        %432 = vmatpush2.bf16.msra.mxu0 0
        %433 = vmatprep.subr.bf16.mxu0 0
        %434 = vmatpush2.bf16.msra.mxu0 0
        %435 = vmatprep.subr.bf16.mxu0 0
        %436 = vmatpush2.bf16.msra.mxu0 0
        %437 = vmatprep.subr.bf16.mxu0 0
        %438 = vmatpush2.bf16.msra.mxu0 0
        %439 = vmatprep.subr.bf16.mxu0 0
        %440 = vmatpush2.bf16.msra.mxu0 0
        %441 = vmatprep.subr.bf16.mxu0 0
        %442 = vmatpush2.bf16.msra.mxu0 0
        %443 = vmatprep.mubr.bf16.mxu0 0
        %444 = vmatmul.mubr.bf16.gmra.mxu0 %v329
        %v445 = vpop.f32.mrf.mxu0
        %v446 = vadd.f32 0.0, %v445
        %v447 = vpop.f32.mrf.mxu0
        %v448 = vadd.f32 0.0, %v447
        %v449 = vpop.f32.mrf.mxu0
        %v450 = vadd.f32 0.0, %v449
        %v451 = vpop.f32.mrf.mxu0
        %v452 = vadd.f32 0.0, %v451
        %453 = vdwg.mxu0
        %v455 = vunpack.c.l.b16 %v283
        %v456 = vpack.c.b16 %v455, %v320
        %v474 = vunpack.c.l.b16 %v284
        %v475 = vunpack.c.h.b16 %v284
        %v476 = vunpack.c.l.b16 %v285
        %v477 = vunpack.c.h.b16 %v285
        %v478 = vunpack.c.l.b16 %v286
        %v479 = vunpack.c.h.b16 %v286
        %v480 = vunpack.c.l.b16 %v287
        %v481 = vunpack.c.h.b16 %v287
        %v482 = vunpack.c.l.b16 %v288
        %v483 = vunpack.c.h.b16 %v288
        %v484 = vunpack.c.l.b16 %v289
        %v485 = vunpack.c.h.b16 %v289
        %v486 = vunpack.c.l.b16 %v290
        %v487 = vunpack.c.h.b16 %v290
        %v488 = vunpack.c.l.b16 %v291
        %v489 = vunpack.c.h.b16 %v291
        %v490 = vunpack.c.l.b16 %v292
        %v491 = vunpack.c.h.b16 %v292
        %v492 = vunpack.c.l.b16 %v293
        %v493 = vunpack.c.h.b16 %v293
        %v494 = vunpack.c.l.b16 %v294
        %v495 = vunpack.c.h.b16 %v294
        %v496 = vunpack.c.l.b16 %v295
        %v497 = vunpack.c.h.b16 %v295
        %v498 = vunpack.c.l.b16 %v296
        %v499 = vunpack.c.h.b16 %v296
        %v500 = vunpack.c.l.b16 %v297
        %v501 = vunpack.c.h.b16 %v297
        %v502 = vunpack.c.l.b16 %v298
        %v503 = vunpack.c.h.b16 %v298
        %v504 = vunpack.c.l.b16 %v299
        %v505 = vunpack.c.h.b16 %v299
        %v506 = vpack.c.b16 %v476, %v474
        %v507 = vpack.c.b16 %v477, %v475
        %v508 = vpack.c.b16 %v480, %v478
        %v509 = vpack.c.b16 %v481, %v479
        %v510 = vpack.c.b16 %v484, %v482
        %v511 = vpack.c.b16 %v485, %v483
        %v512 = vpack.c.b16 %v488, %v486
        %v513 = vpack.c.b16 %v489, %v487
        %v514 = vpack.c.b16 %v492, %v490
        %v515 = vpack.c.b16 %v493, %v491
        %v516 = vpack.c.b16 %v496, %v494
        %v517 = vpack.c.b16 %v497, %v495
        %v518 = vpack.c.b16 %v500, %v498
        %v519 = vpack.c.b16 %v501, %v499
        %v520 = vpack.c.b16 %v504, %v502
        %v521 = vpack.c.b16 %v505, %v503
        %538 = vmatprep.subr.bf16.mxu0 %v521
        %539 = vmatpush1.bf16.msra.mxu0 %v520
        %540 = vmatprep.subr.bf16.mxu0 %v519
        %541 = vmatpush1.bf16.msra.mxu0 %v518
        %542 = vmatprep.subr.bf16.mxu0 %v517
        %543 = vmatpush1.bf16.msra.mxu0 %v516
        %544 = vmatprep.subr.bf16.mxu0 %v515
        %545 = vmatpush1.bf16.msra.mxu0 %v514
        %546 = vmatprep.subr.bf16.mxu0 %v513
        %547 = vmatpush1.bf16.msra.mxu0 %v512
        %548 = vmatprep.subr.bf16.mxu0 %v511
        %549 = vmatpush1.bf16.msra.mxu0 %v510
        %550 = vmatprep.subr.bf16.mxu0 %v509
        %551 = vmatpush1.bf16.msra.mxu0 %v508
        %552 = vmatprep.subr.bf16.mxu0 %v507
        %553 = vmatpush1.bf16.msra.mxu0 %v506
        %554 = vmatprep.subr.bf16.mxu0 0
        %555 = vmatpush2.bf16.msra.mxu0 0
        %556 = vmatprep.subr.bf16.mxu0 0
        %557 = vmatpush2.bf16.msra.mxu0 0
        %558 = vmatprep.subr.bf16.mxu0 0
        %559 = vmatpush2.bf16.msra.mxu0 0
        %560 = vmatprep.subr.bf16.mxu0 0
        %561 = vmatpush2.bf16.msra.mxu0 0
        %562 = vmatprep.subr.bf16.mxu0 0
        %563 = vmatpush2.bf16.msra.mxu0 0
        %564 = vmatprep.subr.bf16.mxu0 0
        %565 = vmatpush2.bf16.msra.mxu0 0
        %566 = vmatprep.subr.bf16.mxu0 0
        %567 = vmatpush2.bf16.msra.mxu0 0
        %568 = vmatprep.subr.bf16.mxu0 0
        %569 = vmatpush2.bf16.msra.mxu0 0
        %570 = vmatprep.mubr.bf16.mxu0 0
        %571 = vmatmul.mubr.bf16.gmra.mxu0 %v456
        %v572 = vpop.f32.mrf.mxu0
        %v573 = vadd.f32 %v446, %v572
        %v574 = vpop.f32.mrf.mxu0
        %v575 = vadd.f32 %v448, %v574
        %v576 = vpop.f32.mrf.mxu0
        %v577 = vadd.f32 %v450, %v576
        %v578 = vpop.f32.mrf.mxu0
        %v579 = vadd.f32 %v452, %v578
        %580 = vdwg.mxu0
        %v581 = vld [vmem:[%s280] sm:$0xe]
        %s582 = scalar_lea.vmem [#allocation4], 256
        %v583 = vld [vmem:[%s582] sm:$0xff]
        %v584 = vld [vmem:[%s582 + $0x8] sm:$0xff]
        %v585 = vld [vmem:[%s582 + $0x10] sm:$0xff]
        %v586 = vld [vmem:[%s582 + $0x18] sm:$0xff]
        %v587 = vld [vmem:[%s582 + $0x20] sm:$0xff]
        %v588 = vld [vmem:[%s582 + $0x28] sm:$0xff]
        %v589 = vld [vmem:[%s582 + $0x30] sm:$0xff]
        %v590 = vld [vmem:[%s582 + $0x38] sm:$0xff]
        %v591 = vld [vmem:[%s582 + $0x40] sm:$0xff]
        %v592 = vld [vmem:[%s582 + $0x48] sm:$0xff]
        %v593 = vld [vmem:[%s582 + $0x50] sm:$0xff]
        %v594 = vld [vmem:[%s582 + $0x58] sm:$0xff]
        %v595 = vld [vmem:[%s582 + $0x60] sm:$0xff]
        %v596 = vld [vmem:[%s582 + $0x68] sm:$0xff]
        %v597 = vld [vmem:[%s582 + $0x70] sm:$0xff]
        %v598 = vld [vmem:[%s582 + $0x78] sm:$0xff]
        %v600 = vunpack.c.l.b16 %v581
        %v601 = vpack.c.b16 %v321, %v600
        %v602 = vrot.slane %v601, 1
        %v620 = vunpack.c.l.b16 %v583
        %v621 = vunpack.c.h.b16 %v583
        %v622 = vunpack.c.l.b16 %v584
        %v623 = vunpack.c.h.b16 %v584
        %v624 = vunpack.c.l.b16 %v585
        %v625 = vunpack.c.h.b16 %v585
        %v626 = vunpack.c.l.b16 %v586
        %v627 = vunpack.c.h.b16 %v586
        %v628 = vunpack.c.l.b16 %v587
        %v629 = vunpack.c.h.b16 %v587
        %v630 = vunpack.c.l.b16 %v588
        %v631 = vunpack.c.h.b16 %v588
        %v632 = vunpack.c.l.b16 %v589
        %v633 = vunpack.c.h.b16 %v589
        %v634 = vunpack.c.l.b16 %v590
        %v635 = vunpack.c.h.b16 %v590
        %v636 = vunpack.c.l.b16 %v591
        %v637 = vunpack.c.h.b16 %v591
        %v638 = vunpack.c.l.b16 %v592
        %v639 = vunpack.c.h.b16 %v592
        %v640 = vunpack.c.l.b16 %v593
        %v641 = vunpack.c.h.b16 %v593
        %v642 = vunpack.c.l.b16 %v594
        %v643 = vunpack.c.h.b16 %v594
        %v644 = vunpack.c.l.b16 %v595
        %v645 = vunpack.c.h.b16 %v595
        %v646 = vunpack.c.l.b16 %v596
        %v647 = vunpack.c.h.b16 %v596
        %v648 = vunpack.c.l.b16 %v597
        %v649 = vunpack.c.h.b16 %v597
        %v650 = vunpack.c.l.b16 %v598
        %v651 = vunpack.c.h.b16 %v598
        %v652 = vpack.c.b16 %v622, %v620
        %v653 = vpack.c.b16 %v623, %v621
        %v654 = vpack.c.b16 %v626, %v624
        %v655 = vpack.c.b16 %v627, %v625
        %v656 = vpack.c.b16 %v630, %v628
        %v657 = vpack.c.b16 %v631, %v629
        %v658 = vpack.c.b16 %v634, %v632
        %v659 = vpack.c.b16 %v635, %v633
        %v660 = vpack.c.b16 %v638, %v636
        %v661 = vpack.c.b16 %v639, %v637
        %v662 = vpack.c.b16 %v642, %v640
        %v663 = vpack.c.b16 %v643, %v641
        %v664 = vpack.c.b16 %v646, %v644
        %v665 = vpack.c.b16 %v647, %v645
        %v666 = vpack.c.b16 %v650, %v648
        %v667 = vpack.c.b16 %v651, %v649
        %684 = vmatprep.subr.bf16.mxu0 %v667
        %685 = vmatpush1.bf16.msra.mxu0 %v666
        %686 = vmatprep.subr.bf16.mxu0 %v665
        %687 = vmatpush1.bf16.msra.mxu0 %v664
        %688 = vmatprep.subr.bf16.mxu0 %v663
        %689 = vmatpush1.bf16.msra.mxu0 %v662
        %690 = vmatprep.subr.bf16.mxu0 %v661
        %691 = vmatpush1.bf16.msra.mxu0 %v660
        %692 = vmatprep.subr.bf16.mxu0 %v659
        %693 = vmatpush1.bf16.msra.mxu0 %v658
        %694 = vmatprep.subr.bf16.mxu0 %v657
        %695 = vmatpush1.bf16.msra.mxu0 %v656
        %696 = vmatprep.subr.bf16.mxu0 %v655
        %697 = vmatpush1.bf16.msra.mxu0 %v654
        %698 = vmatprep.subr.bf16.mxu0 %v653
        %699 = vmatpush1.bf16.msra.mxu0 %v652
        %700 = vmatprep.subr.bf16.mxu0 0
        %701 = vmatpush2.bf16.msra.mxu0 0
        %702 = vmatprep.subr.bf16.mxu0 0
        %703 = vmatpush2.bf16.msra.mxu0 0
        %704 = vmatprep.subr.bf16.mxu0 0
        %705 = vmatpush2.bf16.msra.mxu0 0
        %706 = vmatprep.subr.bf16.mxu0 0
        %707 = vmatpush2.bf16.msra.mxu0 0
        %708 = vmatprep.subr.bf16.mxu0 0
        %709 = vmatpush2.bf16.msra.mxu0 0
        %710 = vmatprep.subr.bf16.mxu0 0
        %711 = vmatpush2.bf16.msra.mxu0 0
        %712 = vmatprep.subr.bf16.mxu0 0
        %713 = vmatpush2.bf16.msra.mxu0 0
        %714 = vmatprep.subr.bf16.mxu0 0
        %715 = vmatpush2.bf16.msra.mxu0 0
        %716 = vmatprep.mubr.bf16.mxu0 0
        %717 = vmatmul.mubr.bf16.gmra.mxu0 %v602
        %v718 = vpop.f32.mrf.mxu0
        %v719 = vadd.f32 0.0, %v718
        %v720 = vpop.f32.mrf.mxu0
        %v721 = vadd.f32 0.0, %v720
        %v722 = vpop.f32.mrf.mxu0
        %v723 = vadd.f32 0.0, %v722
        %v724 = vpop.f32.mrf.mxu0
        %v725 = vadd.f32 0.0, %v724
        %726 = vdwg.mxu0
        %v727 = vadd.f32 %v573, %v719
        %v728 = vadd.f32 %v575, %v721
        %v729 = vadd.f32 %v577, %v723
        %v730 = vadd.f32 %v579, %v725
        %v731 = vld [vmem:[%s2] sm:$0x3]
        %v733 = vlaneseq
        %v734 = vshrl.u32 %v733, 7
        %v735 = vsub.s32 0, %v734
        %v736 = vrot.slane %v731, %v735
        %v737 = vlaneseq
        %v738 = vshrl.u32 %v737, 7
        %v739 = vsub.s32 1, %v738
        %v740 = vrot.slane %v731, %v739
        %v743 = vadd.f32 %v727, %v736
        %v744 = vadd.f32 %v728, %v740
        %v745 = vadd.f32 %v729, %v736
        %v746 = vadd.f32 %v730, %v740
        %v747 = vmax.f32 %v743, 0.0
        %v748 = vmax.f32 %v744, 0.0
        %v749 = vmax.f32 %v745, 0.0
        %v750 = vmax.f32 %v746, 0.0
        %v751 = vpack.c.bf16 %v749, %v747
        %v752 = vpack.c.bf16 %v750, %v748
        %v755 = vunpack.c.l.b16 %v751
        %v756 = vunpack.c.l.b16 %v752
        %v757 = vunpack.c.h.b16 %v751
        %v758 = vunpack.c.h.b16 %v752
        %v759 = vpack.c.b16 %v756, %v755
        %v760 = vpack.c.b16 %v758, %v757
        %763 = vst [vmem:[#allocation2] sm:$0xff] %v759
        %764 = vst [vmem:[#allocation2 + $0x8] sm:$0x11] %v760
        %p765 = scmp.eq.s32.totalorder %s26, 0
        // Predicated region
        $region49: #{tpu_custom_call.1} parent=39 // pred_check
          %p766 = pneg %p765
        $region50: #{tpu_custom_call.1} parent=39 // pred_check_branch
          %768 = sbr.rel (%p766) target = $region52
        $region51: #{tpu_custom_call.1} parent=39 // pred_region
          %vm769 = vcmask 1040384
          %vm770 = vsmask.f32 256
          %vm771 = vmand %vm769, %vm770
          %vm772 = vcmask 1044484
          %vm773 = vsmask.f32 4352
          %vm774 = vmand %vm772, %vm773
          %vm775 = vmor %vm774, %vm771
          %v776 = vld [vmem:[#allocation2] sm:$0x11]
          %v777 = vsel %vm775, 0, %v776
          %778 = vst [vmem:[#allocation2] sm:$0x11] %v777
        $region52: #{tpu_custom_call.1} parent=39 // pred_fallthru
          _
        %p779 = scmp.eq.s32.totalorder %s26, 1
        // Predicated region
        $region53: #{tpu_custom_call.1} parent=39 // pred_check
          %p780 = pneg %p779
        $region54: #{tpu_custom_call.1} parent=39 // pred_check_branch
          %782 = sbr.rel (%p780) target = $region56
        $region55: #{tpu_custom_call.1} parent=39 // pred_region
          %vm783 = vcmask 1040384
          %vm784 = vsmask.f32 7938
          %vm785 = vmand %vm783, %vm784
          %vm786 = vcmask 1044484
          %vm787 = vsmask.f32 7954
          %vm788 = vmand %vm786, %vm787
          %vm789 = vmor %vm788, %vm785
          %v790 = vld [vmem:[#allocation2 + $0x8] sm:$0x11]
          %v791 = vsel %vm789, 0, %v790
          %792 = vst [vmem:[#allocation2 + $0x8] sm:$0x11] %v791
        $region56: #{tpu_custom_call.1} parent=39 // pred_fallthru
          _
        %v793 = vld [vmem:[#allocation2] sm:$0xff]
        %v794 = vld [vmem:[#allocation7] sm:$0xf]
        %v795 = vld [vmem:[#allocation7 + $0x4] sm:$0xf]
        %v796 = vld [vmem:[#allocation7 + $0x8] sm:$0xf]
        %v797 = vld [vmem:[#allocation7 + $0xc] sm:$0xf]
        %v798 = vld [vmem:[#allocation7 + $0x10] sm:$0xf]
        %v799 = vld [vmem:[#allocation7 + $0x14] sm:$0xf]
        %v800 = vld [vmem:[#allocation7 + $0x18] sm:$0xf]
        %v801 = vld [vmem:[#allocation7 + $0x1c] sm:$0xf]
        %v802 = vld [vmem:[#allocation7 + $0x20] sm:$0xf]
        %v803 = vld [vmem:[#allocation7 + $0x24] sm:$0xf]
        %v804 = vld [vmem:[#allocation7 + $0x28] sm:$0xf]
        %v805 = vld [vmem:[#allocation7 + $0x2c] sm:$0xf]
        %v806 = vld [vmem:[#allocation7 + $0x30] sm:$0xf]
        %v807 = vld [vmem:[#allocation7 + $0x34] sm:$0xf]
        %v808 = vld [vmem:[#allocation7 + $0x38] sm:$0xf]
        %v809 = vld [vmem:[#allocation7 + $0x3c] sm:$0xf]
        %v810 = vld [vmem:[#allocation7 + $0x40] sm:$0xf]
        %v811 = vld [vmem:[#allocation7 + $0x44] sm:$0xf]
        %v812 = vld [vmem:[#allocation7 + $0x48] sm:$0xf]
        %v813 = vld [vmem:[#allocation7 + $0x4c] sm:$0xf]
        %v814 = vld [vmem:[#allocation7 + $0x50] sm:$0xf]
        %v815 = vld [vmem:[#allocation7 + $0x54] sm:$0xf]
        %v816 = vld [vmem:[#allocation7 + $0x58] sm:$0xf]
        %v817 = vld [vmem:[#allocation7 + $0x5c] sm:$0xf]
        %v818 = vld [vmem:[#allocation7 + $0x60] sm:$0xf]
        %v819 = vld [vmem:[#allocation7 + $0x64] sm:$0xf]
        %v820 = vld [vmem:[#allocation7 + $0x68] sm:$0xf]
        %v821 = vld [vmem:[#allocation7 + $0x6c] sm:$0xf]
        %v822 = vld [vmem:[#allocation7 + $0x70] sm:$0xf]
        %v823 = vld [vmem:[#allocation7 + $0x74] sm:$0xf]
        %v824 = vld [vmem:[#allocation7 + $0x78] sm:$0xf]
        %v825 = vld [vmem:[#allocation7 + $0x7c] sm:$0xf]
        %v826 = vld [vmem:[#allocation2 + $0x8] sm:$0x11]
        %s827 = scalar_lea.vmem [#allocation7], 128
        %v828 = vld [vmem:[%s827] sm:$0xf]
        %v829 = vld [vmem:[%s827 + $0x4] sm:$0xf]
        %v830 = vld [vmem:[%s827 + $0x8] sm:$0xf]
        %v831 = vld [vmem:[%s827 + $0xc] sm:$0xf]
        %v832 = vld [vmem:[%s827 + $0x10] sm:$0xf]
        %v833 = vld [vmem:[%s827 + $0x14] sm:$0xf]
        %v834 = vld [vmem:[%s827 + $0x18] sm:$0xf]
        %v835 = vld [vmem:[%s827 + $0x1c] sm:$0xf]
        %v836 = vld [vmem:[%s827 + $0x20] sm:$0xf]
        %v837 = vld [vmem:[%s827 + $0x24] sm:$0xf]
        %v838 = vld [vmem:[%s827 + $0x28] sm:$0xf]
        %v839 = vld [vmem:[%s827 + $0x2c] sm:$0xf]
        %v840 = vld [vmem:[%s827 + $0x30] sm:$0xf]
        %v841 = vld [vmem:[%s827 + $0x34] sm:$0xf]
        %v842 = vld [vmem:[%s827 + $0x38] sm:$0xf]
        %v843 = vld [vmem:[%s827 + $0x3c] sm:$0xf]
        %v844 = vld [vmem:[%s827 + $0x40] sm:$0xf]
        %v845 = vld [vmem:[%s827 + $0x44] sm:$0xf]
        %v846 = vld [vmem:[%s827 + $0x48] sm:$0xf]
        %v847 = vld [vmem:[%s827 + $0x4c] sm:$0xf]
        %v848 = vld [vmem:[%s827 + $0x50] sm:$0xf]
        %v849 = vld [vmem:[%s827 + $0x54] sm:$0xf]
        %v850 = vld [vmem:[%s827 + $0x58] sm:$0xf]
        %v851 = vld [vmem:[%s827 + $0x5c] sm:$0xf]
        %v852 = vld [vmem:[%s827 + $0x60] sm:$0xf]
        %v853 = vld [vmem:[%s827 + $0x64] sm:$0xf]
        %v854 = vld [vmem:[%s827 + $0x68] sm:$0xf]
        %v855 = vld [vmem:[%s827 + $0x6c] sm:$0xf]
        %v856 = vld [vmem:[%s827 + $0x70] sm:$0xf]
        %v857 = vld [vmem:[%s827 + $0x74] sm:$0xf]
        %v858 = vld [vmem:[%s827 + $0x78] sm:$0xf]
        %v859 = vld [vmem:[%s827 + $0x7c] sm:$0xf]
        %v862 = vunpack.c.l.b16 %v793
        %v863 = vunpack.c.h.b16 %v793
        %v864 = vunpack.c.l.b16 %v826
        %v865 = vunpack.c.h.b16 %v826
        %v866 = vpack.c.b16 %v864, %v862
        %v867 = vpack.c.b16 %v865, %v863
        %v869 = vshrl.u32 %v866, 16
        %v871 = vshll.u32 %v866, 16
        %v873 = vrot.slane %v871, 1
        %v874 = vor.u32 %v869, %v873
        %v876 = vshrl.u32 %v867, 16
        %v878 = vshll.u32 %v867, 16
        %v880 = vrot.slane %v878, 1
        %v881 = vor.u32 %v876, %v880
        %v916 = vunpack.c.l.b16 %v828
        %v917 = vunpack.c.l.b16 %v829
        %v918 = vunpack.c.l.b16 %v830
        %v919 = vunpack.c.l.b16 %v831
        %v920 = vunpack.c.l.b16 %v832
        %v921 = vunpack.c.l.b16 %v833
        %v922 = vunpack.c.l.b16 %v834
        %v923 = vunpack.c.l.b16 %v835
        %v924 = vunpack.c.l.b16 %v836
        %v925 = vunpack.c.l.b16 %v837
        %v926 = vunpack.c.l.b16 %v838
        %v927 = vunpack.c.l.b16 %v839
        %v928 = vunpack.c.l.b16 %v840
        %v929 = vunpack.c.l.b16 %v841
        %v930 = vunpack.c.l.b16 %v842
        %v931 = vunpack.c.l.b16 %v843
        %v932 = vunpack.c.l.b16 %v844
        %v933 = vunpack.c.l.b16 %v845
        %v934 = vunpack.c.l.b16 %v846
        %v935 = vunpack.c.l.b16 %v847
        %v936 = vunpack.c.l.b16 %v848
        %v937 = vunpack.c.l.b16 %v849
        %v938 = vunpack.c.l.b16 %v850
        %v939 = vunpack.c.l.b16 %v851
        %v940 = vunpack.c.l.b16 %v852
        %v941 = vunpack.c.l.b16 %v853
        %v942 = vunpack.c.l.b16 %v854
        %v943 = vunpack.c.l.b16 %v855
        %v944 = vunpack.c.l.b16 %v856
        %v945 = vunpack.c.l.b16 %v857
        %v946 = vunpack.c.l.b16 %v858
        %v947 = vunpack.c.l.b16 %v859
        %v948 = vpack.c.b16 %v917, %v916
        %v949 = vpack.c.b16 %v919, %v918
        %v950 = vpack.c.b16 %v921, %v920
        %v951 = vpack.c.b16 %v923, %v922
        %v952 = vpack.c.b16 %v925, %v924
        %v953 = vpack.c.b16 %v927, %v926
        %v954 = vpack.c.b16 %v929, %v928
        %v955 = vpack.c.b16 %v931, %v930
        %v956 = vpack.c.b16 %v933, %v932
        %v957 = vpack.c.b16 %v935, %v934
        %v958 = vpack.c.b16 %v937, %v936
        %v959 = vpack.c.b16 %v939, %v938
        %v960 = vpack.c.b16 %v941, %v940
        %v961 = vpack.c.b16 %v943, %v942
        %v962 = vpack.c.b16 %v945, %v944
        %v963 = vpack.c.b16 %v947, %v946
        %980 = vmatprep.subr.bf16.mxu0 0
        %981 = vmatpush1.bf16.msra.mxu0 %v955
        %982 = vmatprep.subr.bf16.mxu0 0
        %983 = vmatpush1.bf16.msra.mxu0 %v954
        %984 = vmatprep.subr.bf16.mxu0 0
        %985 = vmatpush1.bf16.msra.mxu0 %v953
        %986 = vmatprep.subr.bf16.mxu0 0
        %987 = vmatpush1.bf16.msra.mxu0 %v952
        %988 = vmatprep.subr.bf16.mxu0 0
        %989 = vmatpush1.bf16.msra.mxu0 %v951
        %990 = vmatprep.subr.bf16.mxu0 0
        %991 = vmatpush1.bf16.msra.mxu0 %v950
        %992 = vmatprep.subr.bf16.mxu0 0
        %993 = vmatpush1.bf16.msra.mxu0 %v949
        %994 = vmatprep.subr.bf16.mxu0 0
        %995 = vmatpush1.bf16.msra.mxu0 %v948
        %996 = vmatprep.subr.bf16.mxu0 0
        %997 = vmatpush2.bf16.msra.mxu0 %v963
        %998 = vmatprep.subr.bf16.mxu0 0
        %999 = vmatpush2.bf16.msra.mxu0 %v962
        %1000 = vmatprep.subr.bf16.mxu0 0
        %1001 = vmatpush2.bf16.msra.mxu0 %v961
        %1002 = vmatprep.subr.bf16.mxu0 0
        %1003 = vmatpush2.bf16.msra.mxu0 %v960
        %1004 = vmatprep.subr.bf16.mxu0 0
        %1005 = vmatpush2.bf16.msra.mxu0 %v959
        %1006 = vmatprep.subr.bf16.mxu0 0
        %1007 = vmatpush2.bf16.msra.mxu0 %v958
        %1008 = vmatprep.subr.bf16.mxu0 0
        %1009 = vmatpush2.bf16.msra.mxu0 %v957
        %1010 = vmatprep.subr.bf16.mxu0 0
        %1011 = vmatpush2.bf16.msra.mxu0 %v956
        %1012 = vmatprep.mubr.bf16.mxu0 %v881
        %1013 = vmatmul.mubr.bf16.gmra.mxu0 %v874
        %v1014 = vpop.f32.mrf.mxu0
        %v1015 = vadd.f32 0.0, %v1014
        %v1016 = vpop.f32.mrf.mxu0
        %v1017 = vpop.f32.mrf.mxu0
        %v1018 = vpop.f32.mrf.mxu0
        %1019 = vdwg.mxu0
        %v1020 = vpack.c.b16 %v862, %v862
        %v1021 = vpack.c.b16 %v863, %v863
        %v1056 = vunpack.c.l.b16 %v794
        %v1057 = vunpack.c.l.b16 %v795
        %v1058 = vunpack.c.l.b16 %v796
        %v1059 = vunpack.c.l.b16 %v797
        %v1060 = vunpack.c.l.b16 %v798
        %v1061 = vunpack.c.l.b16 %v799
        %v1062 = vunpack.c.l.b16 %v800
        %v1063 = vunpack.c.l.b16 %v801
        %v1064 = vunpack.c.l.b16 %v802
        %v1065 = vunpack.c.l.b16 %v803
        %v1066 = vunpack.c.l.b16 %v804
        %v1067 = vunpack.c.l.b16 %v805
        %v1068 = vunpack.c.l.b16 %v806
        %v1069 = vunpack.c.l.b16 %v807
        %v1070 = vunpack.c.l.b16 %v808
        %v1071 = vunpack.c.l.b16 %v809
        %v1072 = vunpack.c.l.b16 %v810
        %v1073 = vunpack.c.l.b16 %v811
        %v1074 = vunpack.c.l.b16 %v812
        %v1075 = vunpack.c.l.b16 %v813
        %v1076 = vunpack.c.l.b16 %v814
        %v1077 = vunpack.c.l.b16 %v815
        %v1078 = vunpack.c.l.b16 %v816
        %v1079 = vunpack.c.l.b16 %v817
        %v1080 = vunpack.c.l.b16 %v818
        %v1081 = vunpack.c.l.b16 %v819
        %v1082 = vunpack.c.l.b16 %v820
        %v1083 = vunpack.c.l.b16 %v821
        %v1084 = vunpack.c.l.b16 %v822
        %v1085 = vunpack.c.l.b16 %v823
        %v1086 = vunpack.c.l.b16 %v824
        %v1087 = vunpack.c.l.b16 %v825
        %v1088 = vpack.c.b16 %v1057, %v1056
        %v1089 = vpack.c.b16 %v1059, %v1058
        %v1090 = vpack.c.b16 %v1061, %v1060
        %v1091 = vpack.c.b16 %v1063, %v1062
        %v1092 = vpack.c.b16 %v1065, %v1064
        %v1093 = vpack.c.b16 %v1067, %v1066
        %v1094 = vpack.c.b16 %v1069, %v1068
        %v1095 = vpack.c.b16 %v1071, %v1070
        %v1096 = vpack.c.b16 %v1073, %v1072
        %v1097 = vpack.c.b16 %v1075, %v1074
        %v1098 = vpack.c.b16 %v1077, %v1076
        %v1099 = vpack.c.b16 %v1079, %v1078
        %v1100 = vpack.c.b16 %v1081, %v1080
        %v1101 = vpack.c.b16 %v1083, %v1082
        %v1102 = vpack.c.b16 %v1085, %v1084
        %v1103 = vpack.c.b16 %v1087, %v1086
        %1120 = vmatprep.subr.bf16.mxu0 0
        %1121 = vmatpush1.bf16.msra.mxu0 %v1095
        %1122 = vmatprep.subr.bf16.mxu0 0
        %1123 = vmatpush1.bf16.msra.mxu0 %v1094
        %1124 = vmatprep.subr.bf16.mxu0 0
        %1125 = vmatpush1.bf16.msra.mxu0 %v1093
        %1126 = vmatprep.subr.bf16.mxu0 0
        %1127 = vmatpush1.bf16.msra.mxu0 %v1092
        %1128 = vmatprep.subr.bf16.mxu0 0
        %1129 = vmatpush1.bf16.msra.mxu0 %v1091
        %1130 = vmatprep.subr.bf16.mxu0 0
        %1131 = vmatpush1.bf16.msra.mxu0 %v1090
        %1132 = vmatprep.subr.bf16.mxu0 0
        %1133 = vmatpush1.bf16.msra.mxu0 %v1089
        %1134 = vmatprep.subr.bf16.mxu0 0
        %1135 = vmatpush1.bf16.msra.mxu0 %v1088
        %1136 = vmatprep.subr.bf16.mxu0 0
        %1137 = vmatpush2.bf16.msra.mxu0 %v1103
        %1138 = vmatprep.subr.bf16.mxu0 0
        %1139 = vmatpush2.bf16.msra.mxu0 %v1102
        %1140 = vmatprep.subr.bf16.mxu0 0
        %1141 = vmatpush2.bf16.msra.mxu0 %v1101
        %1142 = vmatprep.subr.bf16.mxu0 0
        %1143 = vmatpush2.bf16.msra.mxu0 %v1100
        %1144 = vmatprep.subr.bf16.mxu0 0
        %1145 = vmatpush2.bf16.msra.mxu0 %v1099
        %1146 = vmatprep.subr.bf16.mxu0 0
        %1147 = vmatpush2.bf16.msra.mxu0 %v1098
        %1148 = vmatprep.subr.bf16.mxu0 0
        %1149 = vmatpush2.bf16.msra.mxu0 %v1097
        %1150 = vmatprep.subr.bf16.mxu0 0
        %1151 = vmatpush2.bf16.msra.mxu0 %v1096
        %1152 = vmatprep.mubr.bf16.mxu0 %v1021
        %1153 = vmatmul.mubr.bf16.gmra.mxu0 %v1020
        %v1154 = vpop.f32.mrf.mxu0
        %v1155 = vadd.f32 %v1015, %v1154
        %v1156 = vpop.f32.mrf.mxu0
        %v1157 = vpop.f32.mrf.mxu0
        %v1158 = vpop.f32.mrf.mxu0
        %1159 = vdwg.mxu0
        %v1160 = vld [vmem:[#allocation2] sm:$0xee]
        %s1161 = scalar_lea.vmem [#allocation7], 256
        %v1162 = vld [vmem:[%s1161] sm:$0xf]
        %v1163 = vld [vmem:[%s1161 + $0x4] sm:$0xf]
        %v1164 = vld [vmem:[%s1161 + $0x8] sm:$0xf]
        %v1165 = vld [vmem:[%s1161 + $0xc] sm:$0xf]
        %v1166 = vld [vmem:[%s1161 + $0x10] sm:$0xf]
        %v1167 = vld [vmem:[%s1161 + $0x14] sm:$0xf]
        %v1168 = vld [vmem:[%s1161 + $0x18] sm:$0xf]
        %v1169 = vld [vmem:[%s1161 + $0x1c] sm:$0xf]
        %v1170 = vld [vmem:[%s1161 + $0x20] sm:$0xf]
        %v1171 = vld [vmem:[%s1161 + $0x24] sm:$0xf]
        %v1172 = vld [vmem:[%s1161 + $0x28] sm:$0xf]
        %v1173 = vld [vmem:[%s1161 + $0x2c] sm:$0xf]
        %v1174 = vld [vmem:[%s1161 + $0x30] sm:$0xf]
        %v1175 = vld [vmem:[%s1161 + $0x34] sm:$0xf]
        %v1176 = vld [vmem:[%s1161 + $0x38] sm:$0xf]
        %v1177 = vld [vmem:[%s1161 + $0x3c] sm:$0xf]
        %v1178 = vld [vmem:[%s1161 + $0x40] sm:$0xf]
        %v1179 = vld [vmem:[%s1161 + $0x44] sm:$0xf]
        %v1180 = vld [vmem:[%s1161 + $0x48] sm:$0xf]
        %v1181 = vld [vmem:[%s1161 + $0x4c] sm:$0xf]
        %v1182 = vld [vmem:[%s1161 + $0x50] sm:$0xf]
        %v1183 = vld [vmem:[%s1161 + $0x54] sm:$0xf]
        %v1184 = vld [vmem:[%s1161 + $0x58] sm:$0xf]
        %v1185 = vld [vmem:[%s1161 + $0x5c] sm:$0xf]
        %v1186 = vld [vmem:[%s1161 + $0x60] sm:$0xf]
        %v1187 = vld [vmem:[%s1161 + $0x64] sm:$0xf]
        %v1188 = vld [vmem:[%s1161 + $0x68] sm:$0xf]
        %v1189 = vld [vmem:[%s1161 + $0x6c] sm:$0xf]
        %v1190 = vld [vmem:[%s1161 + $0x70] sm:$0xf]
        %v1191 = vld [vmem:[%s1161 + $0x74] sm:$0xf]
        %v1192 = vld [vmem:[%s1161 + $0x78] sm:$0xf]
        %v1193 = vld [vmem:[%s1161 + $0x7c] sm:$0xf]
        %v1195 = vunpack.c.l.b16 %v1160
        %v1196 = vunpack.c.h.b16 %v1160
        %v1197 = vpack.c.b16 %v864, %v1195
        %v1198 = vpack.c.b16 %v865, %v1196
        %v1199 = vrot.slane %v1197, 1
        %v1200 = vrot.slane %v1198, 1
        %v1235 = vunpack.c.l.b16 %v1162
        %v1236 = vunpack.c.l.b16 %v1163
        %v1237 = vunpack.c.l.b16 %v1164
        %v1238 = vunpack.c.l.b16 %v1165
        %v1239 = vunpack.c.l.b16 %v1166
        %v1240 = vunpack.c.l.b16 %v1167
        %v1241 = vunpack.c.l.b16 %v1168
        %v1242 = vunpack.c.l.b16 %v1169
        %v1243 = vunpack.c.l.b16 %v1170
        %v1244 = vunpack.c.l.b16 %v1171
        %v1245 = vunpack.c.l.b16 %v1172
        %v1246 = vunpack.c.l.b16 %v1173
        %v1247 = vunpack.c.l.b16 %v1174
        %v1248 = vunpack.c.l.b16 %v1175
        %v1249 = vunpack.c.l.b16 %v1176
        %v1250 = vunpack.c.l.b16 %v1177
        %v1251 = vunpack.c.l.b16 %v1178
        %v1252 = vunpack.c.l.b16 %v1179
        %v1253 = vunpack.c.l.b16 %v1180
        %v1254 = vunpack.c.l.b16 %v1181
        %v1255 = vunpack.c.l.b16 %v1182
        %v1256 = vunpack.c.l.b16 %v1183
        %v1257 = vunpack.c.l.b16 %v1184
        %v1258 = vunpack.c.l.b16 %v1185
        %v1259 = vunpack.c.l.b16 %v1186
        %v1260 = vunpack.c.l.b16 %v1187
        %v1261 = vunpack.c.l.b16 %v1188
        %v1262 = vunpack.c.l.b16 %v1189
        %v1263 = vunpack.c.l.b16 %v1190
        %v1264 = vunpack.c.l.b16 %v1191
        %v1265 = vunpack.c.l.b16 %v1192
        %v1266 = vunpack.c.l.b16 %v1193
        %v1267 = vpack.c.b16 %v1236, %v1235
        %v1268 = vpack.c.b16 %v1238, %v1237
        %v1269 = vpack.c.b16 %v1240, %v1239
        %v1270 = vpack.c.b16 %v1242, %v1241
        %v1271 = vpack.c.b16 %v1244, %v1243
        %v1272 = vpack.c.b16 %v1246, %v1245
        %v1273 = vpack.c.b16 %v1248, %v1247
        %v1274 = vpack.c.b16 %v1250, %v1249
        %v1275 = vpack.c.b16 %v1252, %v1251
        %v1276 = vpack.c.b16 %v1254, %v1253
        %v1277 = vpack.c.b16 %v1256, %v1255
        %v1278 = vpack.c.b16 %v1258, %v1257
        %v1279 = vpack.c.b16 %v1260, %v1259
        %v1280 = vpack.c.b16 %v1262, %v1261
        %v1281 = vpack.c.b16 %v1264, %v1263
        %v1282 = vpack.c.b16 %v1266, %v1265
        %1299 = vmatprep.subr.bf16.mxu0 0
        %1300 = vmatpush1.bf16.msra.mxu0 %v1274
        %1301 = vmatprep.subr.bf16.mxu0 0
        %1302 = vmatpush1.bf16.msra.mxu0 %v1273
        %1303 = vmatprep.subr.bf16.mxu0 0
        %1304 = vmatpush1.bf16.msra.mxu0 %v1272
        %1305 = vmatprep.subr.bf16.mxu0 0
        %1306 = vmatpush1.bf16.msra.mxu0 %v1271
        %1307 = vmatprep.subr.bf16.mxu0 0
        %1308 = vmatpush1.bf16.msra.mxu0 %v1270
        %1309 = vmatprep.subr.bf16.mxu0 0
        %1310 = vmatpush1.bf16.msra.mxu0 %v1269
        %1311 = vmatprep.subr.bf16.mxu0 0
        %1312 = vmatpush1.bf16.msra.mxu0 %v1268
        %1313 = vmatprep.subr.bf16.mxu0 0
        %1314 = vmatpush1.bf16.msra.mxu0 %v1267
        %1315 = vmatprep.subr.bf16.mxu0 0
        %1316 = vmatpush2.bf16.msra.mxu0 %v1282
        %1317 = vmatprep.subr.bf16.mxu0 0
        %1318 = vmatpush2.bf16.msra.mxu0 %v1281
        %1319 = vmatprep.subr.bf16.mxu0 0
        %1320 = vmatpush2.bf16.msra.mxu0 %v1280
        %1321 = vmatprep.subr.bf16.mxu0 0
        %1322 = vmatpush2.bf16.msra.mxu0 %v1279
        %1323 = vmatprep.subr.bf16.mxu0 0
        %1324 = vmatpush2.bf16.msra.mxu0 %v1278
        %1325 = vmatprep.subr.bf16.mxu0 0
        %1326 = vmatpush2.bf16.msra.mxu0 %v1277
        %1327 = vmatprep.subr.bf16.mxu0 0
        %1328 = vmatpush2.bf16.msra.mxu0 %v1276
        %1329 = vmatprep.subr.bf16.mxu0 0
        %1330 = vmatpush2.bf16.msra.mxu0 %v1275
        %1331 = vmatprep.mubr.bf16.mxu0 %v1200
        %1332 = vmatmul.mubr.bf16.gmra.mxu0 %v1199
        %v1333 = vpop.f32.mrf.mxu0
        %v1334 = vadd.f32 0.0, %v1333
        %v1335 = vpop.f32.mrf.mxu0
        %v1336 = vpop.f32.mrf.mxu0
        %v1337 = vpop.f32.mrf.mxu0
        %1338 = vdwg.mxu0
        %v1339 = vadd.f32 %v1155, %v1334
        %v1340 = vld [vmem:[%s4] sm:$0x1]
        %v1342 = vlaneseq
        %v1343 = vshrl.u32 %v1342, 7
        %v1344 = vsub.s32 0, %v1343
        %v1345 = vrot.slane %v1340, %v1344
        %v1347 = vadd.f32 %v1339, %v1345
        %v1348 = vmax.f32 %v1347, 0.0
        %1350 = vrot.lane.b32.xlu0 %v1348, 64
        %v1351 = vpop.permute.xlu0 %1350
        %v1353 = vmax.f32 %v1348, %v1351
        %vm1354 = vcmask 523264
        %1355 = vst.msk [vmem:[#allocation3] sm:$0xff] %vm1354, %v1353
        %v1356 = vld [vmem:[#allocation3] ss:$2 sm:$0xf]
        %s1357 = scalar_lea.vmem [#allocation3], 1
        %v1358 = vld [vmem:[%s1357] ss:$2 sm:$0xf]
        %v1359 = vmax.f32 %v1356, %v1358
        %vm1360 = vcmask 519168
        %1361 = vst.msk [vmem:[%s271] sm:$0xf] %vm1360, %v1359
        %s1362 = sand.u32 %s155, 1
        %s1363 = scalar_lea.sflag [#allocation6], %s1362
        %s1364 = sand.u32 %s155, 1
        %s1365 = smul.addr %s1364, 4
        %s1366 = scalar_lea.vmem [#allocation9], %s1365
        // Predicated region
        $region57: #{tpu_custom_call.1} parent=39 // pred_check
          %p1367 = pneg %p165
        $region58: #{tpu_custom_call.1} parent=39 // pred_check_branch
          %1369 = sbr.rel (%p1367) target = $region60
        $region59: #{tpu_custom_call.1} parent=39 // pred_region
          %s1371 = ssub.s32 64, 64
          %1372 = vsyncadd %s1363, %s1371
          %s1373 = smul.addr %s25, 2
          %s1374 = sadd.s32 %s26, %s1373
          %s1375 = smul.addr %s1374, 64
          %s1376 = scalar_lea.hbm %s5, %s1375
          %s1378 = sshll.u32 %s1366, 4
          %s1379 = int_to_ptr.vmem [resolvable:$true] %s1378
          %1381 = dma.vmem_to_hbm [thread:$0]  %s1379, 64, %s1376, %s1363
        $region60: #{tpu_custom_call.1} parent=39 // pred_fallthru
          _
      $region40: #{tpu_custom_call.1} parent=5 // pred_fallthru
        _
      %p1382 = scmp.le.s32.totalorder 2, %s16
      // Predicated region
      $region61: #{tpu_custom_call.1} parent=5 // pred_check
        %p1383 = pneg %p1382
      $region62: #{tpu_custom_call.1} parent=5 // pred_check_branch
        %1385 = sbr.rel (%p1383) target = $region64
      $region63: #{tpu_custom_call.1} parent=5 // pred_region
        %s1386 = ssub.s32 %s16, 2
        // Predicated region
        $region65: #{tpu_custom_call.1} parent=63 // pred_check
          %p1387 = pneg %p171
        $region66: #{tpu_custom_call.1} parent=63 // pred_check_branch
          %1389 = sbr.rel (%p1387) target = $region68
        $region67: #{tpu_custom_call.1} parent=63 // pred_region
          %s1390 = sand.u32 %s156, 1
          %s1391 = scalar_lea.sflag [#allocation6], %s1390
          %s1392 = sand.u32 %s156, 1
          %s1393 = smul.addr %s1392, 4
          %s1394 = scalar_lea.vmem [#allocation9], %s1393
          %1395 = dma.done %s1391, 64
        $region68: #{tpu_custom_call.1} parent=63 // pred_fallthru
          _
      $region64: #{tpu_custom_call.1} parent=5 // pred_fallthru
        _
    $region6: #{tpu_custom_call.1} parent=1 // loop_footer
      %s20 = sadd.s32 1, %s16
    $region7: #{tpu_custom_call.1} parent=1 // loop_footer_branch
      %15 = sbr.rel target = $region3
    $region8: #{tpu_custom_call.1} parent=1 // loop_exit
      _
    %1396 = vsyncpa [#allocation5], 1
    %s1397 = scalar_lea.sflag [#allocation5], 1
    %1398 = vsyncpa %s1397, 1
    %1399 = vsyncpa [#allocation8], 1
    %1400 = vsyncpa [#allocation6], 1
    %s1401 = scalar_lea.sflag [#allocation6], 1
    %1402 = vsyncpa %s1401, 1

</llo_original>
